<compile_context>
chip_gen: v6e
topology: v6e:2x2x1
jax: 0.10.0
libtpu: 0.0.40
codegen_flags: <defaults>
</compile_context>

<pallas_src>
import functools

import jax
import jax.numpy as jnp
from jax.experimental import pallas as pl
from jax.experimental.pallas import tpu as pltpu


# ----------------------------- Pallas kernel -------------------------------

def _det_head_kernel(x_ref, ml_ref, mr_ref, w1_ref, b1_ref, w2_ref, b2_ref,
                     o_ref, *, width):
    """Fused Conv3x3(pad=1) + bias + SiLU + Conv1x1 + bias for one row block.

    x_ref : (Cin, Lb)    bf16  flattened (TR+2, W) zero-padded image rows for
                               this (batch, row-block), +1 pad elem each end
    ml_ref: (1, TR*W)    bf16  mask for the left  tap (0 at w == 0)
    mr_ref: (1, TR*W)    bf16  mask for the right tap (0 at w == W-1)
    w1_ref: (9, C, Cin)  bf16  stem weights, tap index k = 3*di + dj
    b1_ref: (C, 1)       f32
    w2_ref: (NO, C)      bf16  head weights (output-major)
    b2_ref: (NO, 1)      f32
    o_ref : (NO, TR*W)   f32   lane-dense, channel-major output tile
    """
    trw = o_ref.shape[-1]
    c_hidden = w1_ref.shape[1]

    acc = jnp.zeros((c_hidden, trw), jnp.float32)
    for di in range(3):
        for dj in range(3):
            # Static lane slice: tap (di, dj) of the 3x3 window for every
            # output position of this row block (in-kernel im2col).
            start = di * width + dj
            slab = x_ref[:, start:start + trw]          # (Cin, TR*W) bf16
            if dj == 0:
                slab = slab * ml_ref[...]               # zero invalid left tap
            elif dj == 2:
                slab = slab * mr_ref[...]               # zero invalid right tap
            acc = acc + jnp.dot(w1_ref[3 * di + dj], slab,
                                preferred_element_type=jnp.float32)

    h = acc + b1_ref[...]
    h = h * jax.nn.sigmoid(h)                           # SiLU in f32 (v5e-safe)
    y = jnp.dot(w2_ref[...], h.astype(w2_ref.dtype),
                preferred_element_type=jnp.float32)
    o_ref[...] = (y + b2_ref[...]).astype(o_ref.dtype)


def _fused_det_head(x_blocks, mask_l, mask_r, w1, b1, w2, b2, *, width,
                    tile_rows):
    """x_blocks: (B, NB, Cin, Lb) bf16  ->  (B, NB, NO, TR*W) f32."""
    B, NB, Cin, Lb = x_blocks.shape
    K9, C, _ = w1.shape
    NO = w2.shape[0]
    trw = tile_rows * width

    kernel = functools.partial(_det_head_kernel, width=width)
    return pl.pallas_call(
        kernel,
        out_shape=jax.ShapeDtypeStruct((B, NB, NO, trw), jnp.float32),
        grid_spec=pltpu.PrefetchScalarGridSpec(
            num_scalar_prefetch=0,
            grid=(B, NB),
            in_specs=[
                # one (batch, row-block) image slab per grid step
                pl.BlockSpec((None, None, Cin, Lb), lambda b, r: (b, r, 0, 0)),
                # masks + weights: constant index map -> stay resident in VMEM
                pl.BlockSpec((1, trw), lambda b, r: (0, 0)),
                pl.BlockSpec((1, trw), lambda b, r: (0, 0)),
                pl.BlockSpec((K9, C, Cin), lambda b, r: (0, 0, 0)),
                pl.BlockSpec((C, 1), lambda b, r: (0, 0)),
                pl.BlockSpec((NO, C), lambda b, r: (0, 0)),
                pl.BlockSpec((NO, 1), lambda b, r: (0, 0)),
            ],
            out_specs=pl.BlockSpec((None, None, NO, trw),
                                   lambda b, r: (b, r, 0, 0)),
        ),
        compiler_params=pltpu.CompilerParams(
            # both grid axes are independent -> v7x megacore can shard them
            dimension_semantics=("parallel", "parallel"),
            # headroom above the 16 MiB v5e scoped-VMEM default for large tiles
            vmem_limit_bytes=32 * 1024 * 1024,
        ),
    )(x_blocks, mask_l, mask_r, w1, b1, w2, b2)


# ------------------------------- glue (JAX) ---------------------------------

def _row_blocks(im_nchw_bf16, tile_rows):
    """Build overlapping, flattened row blocks (the fused-im2col input).

    Output: (B, NB, Cin, (TR+2)*W + 2) where block r holds zero-padded image
    rows [r*TR, r*TR + TR + 2) flattened row-major, with one extra zero at
    each end of the flat axis so every 3x3 tap is a static, in-bounds lane
    slice.  Only ~(TR+2)/TR of the image goes to HBM (vs 9x for im2col).
    """
    B, Cin, H, W = im_nchw_bf16.shape
    NB = -(-H // tile_rows)                         # cdiv
    Hp = NB * tile_rows
    xp = jnp.pad(im_nchw_bf16, ((0, 0), (0, 0), (1, Hp - H + 1), (0, 0)))
    blocks = jnp.stack(
        [xp[:, :, r * tile_rows: r * tile_rows + tile_rows + 2, :]
         for r in range(NB)], axis=1)               # (B, NB, Cin, TR+2, W)
    flat = blocks.reshape(B, NB, Cin, (tile_rows + 2) * W)
    flat = jnp.pad(flat, ((0, 0), (0, 0), (0, 0), (1, 1)))
    return flat, NB


def _edge_masks(tile_rows, W):
    col = jnp.arange(tile_rows * W, dtype=jnp.int32) % W
    mask_l = (col != 0).astype(jnp.bfloat16).reshape(1, -1)
    mask_r = (col != (W - 1)).astype(jnp.bfloat16).reshape(1, -1)
    return mask_l, mask_r


class LoadOnnxModelPallas:
    """Synthetic stand-in for LoadOnnxModel (torchscript detector wrapper).

    # TODO(synk): the real module runs an opaque .onnx/.torchscript network
    # loaded from disk; it is replaced here by a deterministic synthetic
    # stem + detection head so the forward pass has real, checkable compute.
    """

    _TARGET_TILE_LANES = 2048   # output lanes per grid step (amortize overhead)

    def __init__(self, cin=3, hidden=32, num_out=24, seed=0):
        self.fp16 = False
        self.stride = 32
        self.cin = cin
        self.hidden = hidden
        self.num_out = num_out
        k1, k2, k3, k4 = jax.random.split(jax.random.PRNGKey(seed), 4)
        K = 9 * cin
        # Stem weights, tap-major (9, C, Cin); bf16 data path.
        self.w1 = (jax.random.normal(k1, (9, hidden, cin), jnp.float32)
                   * (1.0 / jnp.sqrt(K))).astype(jnp.bfloat16)
        self.b1 = jax.random.normal(k2, (hidden, 1), jnp.float32) * 0.1
        # Head weights, output-major so the kernel output is channel-major.
        self.w2 = (jax.random.normal(k3, (num_out, hidden), jnp.float32)
                   * (1.0 / jnp.sqrt(hidden))).astype(jnp.bfloat16)
        self.b2 = jax.random.normal(k4, (num_out, 1), jnp.float32) * 0.1

    def __call__(self, im_nchw):
        # mirror `if self.fp16 ...: im = im.half()`  (fp16 is False here)
        im = im_nchw.astype(jnp.float32)
        B, Cin, H, W = im.shape
        assert Cin == self.cin
        # Rows per grid step; also keeps grid length >= B so v7x's 2 TCs stay fed.
        tile_rows = max(1, min(H, self._TARGET_TILE_LANES // W))
        x_blocks, NB = _row_blocks(im.astype(jnp.bfloat16), tile_rows)
        mask_l, mask_r = _edge_masks(tile_rows, W)
        y = _fused_det_head(x_blocks, mask_l, mask_r,
                            self.w1, self.b1, self.w2, self.b2,
                            width=W, tile_rows=tile_rows)
        # (B, NB, NO, TR*W) -> (B, NO, H, W).  NB == 1 for typical small
        # images, so the transpose is degenerate (no data movement).
        y = y.transpose(0, 2, 1, 3).reshape(B, self.num_out, NB * tile_rows, W)
        return y[:, :, :H, :]


# ----------------------------- pure-JAX reference ---------------------------

def _reference_forward(im_nchw_f32, w1, b1, w2, b2):
    """Same synthetic net in plain JAX (same bf16 rounding of inputs/weights)."""
    x = im_nchw_f32.astype(jnp.bfloat16).astype(jnp.float32)
    B, Cin, H, W = x.shape
    C = w1.shape[1]
    NO = w2.shape[0]
    xp = jnp.pad(x, ((0, 0), (0, 0), (1, 1), (1, 1)))
    w1f = w1.astype(jnp.float32)
    hid = jnp.zeros((B, C, H, W), jnp.float32)
    for di in range(3):
        for dj in range(3):
            tap = xp[:, :, di:di + H, dj:dj + W]
            hid = hid + jnp.einsum('ck,bkhw->bchw', w1f[3 * di + dj], tap)
    hid = hid + b1.reshape(1, C, 1, 1)
    hid = hid * jax.nn.sigmoid(hid)
    hid = hid.astype(jnp.bfloat16).astype(jnp.float32)
    y = jnp.einsum('nc,bchw->bnhw', w2.astype(jnp.float32), hid)
    return y + b2.reshape(1, NO, 1, 1)


# --------------------------------- main -------------------------------------

if __name__ == "__main__":
    key = jax.random.PRNGKey(0)
    B, Cin, H, W = 2, 3, 16, 16                 # small detector-style input
    im = jax.random.normal(key, (B, Cin, H, W), jnp.float32)

    model = LoadOnnxModelPallas(cin=Cin, hidden=32, num_out=24, seed=0)
    y = jax.block_until_ready(model(im))

    y_ref = _reference_forward(im, model.w1, model.b1, model.w2, model.b2)
    assert y.shape == (B, 24, H, W), y.shape
    max_err = float(jnp.max(jnp.abs(y - y_ref)))
    assert jnp.allclose(y, y_ref, atol=1e-2, rtol=1e-2), max_err

    print("KERNEL_OK")
</pallas_src>

<mosaic_0001>
module attributes {stable_mosaic.version = 11 : i64} {
  func.func @_det_head_kernel(%arg0: i32, %arg1: i32, %arg2: memref<1x1x3x290xbf16, #tpu.memory_space<vmem>>, %arg3: memref<1x256xbf16, #tpu.memory_space<vmem>>, %arg4: memref<1x256xbf16, #tpu.memory_space<vmem>>, %arg5: memref<9x32x3xbf16, #tpu.memory_space<vmem>>, %arg6: memref<32x1xf32, #tpu.memory_space<vmem>>, %arg7: memref<24x32xbf16, #tpu.memory_space<vmem>>, %arg8: memref<24x1xf32, #tpu.memory_space<vmem>>, %arg9: memref<1x1x24x256xf32, #tpu.memory_space<vmem>>) attributes {dimension_semantics = [#tpu.dimension_semantics<parallel>, #tpu.dimension_semantics<parallel>], iteration_bounds = array<i64: 2, 1>, scalar_prefetch = 0 : i64, scratch_operands = 0 : i64, tpu.core_type = #tpu.core_type<tc>, window_params = [{transform_indices = @transform_0, window_bounds = array<i64: 1, 1, 3, 290>}, {pipeline_mode = #tpu.pipeline_mode<synchronous>, transform_indices = @transform_1, window_bounds = array<i64: 1, 256>}, {pipeline_mode = #tpu.pipeline_mode<synchronous>, transform_indices = @transform_2, window_bounds = array<i64: 1, 256>}, {pipeline_mode = #tpu.pipeline_mode<synchronous>, transform_indices = @transform_3, window_bounds = array<i64: 9, 32, 3>}, {pipeline_mode = #tpu.pipeline_mode<synchronous>, transform_indices = @transform_4, window_bounds = array<i64: 32, 1>}, {pipeline_mode = #tpu.pipeline_mode<synchronous>, transform_indices = @transform_5, window_bounds = array<i64: 24, 32>}, {pipeline_mode = #tpu.pipeline_mode<synchronous>, transform_indices = @transform_6, window_bounds = array<i64: 24, 1>}, {transform_indices = @transform_7, window_bounds = array<i64: 1, 1, 24, 256>}]} {
    %cst = arith.constant 0.000000e+00 : f32
    %0 = vector.broadcast %cst : f32 to vector<32x256xf32>
    %c0 = arith.constant 0 : index
    %c0_0 = arith.constant 0 : index
    %c0_1 = arith.constant 0 : index
    %c0_2 = arith.constant 0 : index
    %1 = vector.load %arg2[%c0, %c0_0, %c0_1, %c0_2] : memref<1x1x3x290xbf16, #tpu.memory_space<vmem>>, vector<1x1x3x256xbf16>
    %2 = vector.shape_cast %1 : vector<1x1x3x256xbf16> to vector<3x256xbf16>
    %c0_3 = arith.constant 0 : index
    %c0_4 = arith.constant 0 : index
    %3 = vector.load %arg3[%c0_3, %c0_4] : memref<1x256xbf16, #tpu.memory_space<vmem>>, vector<1x256xbf16>
    %4 = vector.broadcast %3 : vector<1x256xbf16> to vector<3x256xbf16>
    %5 = arith.mulf %2, %4 : vector<3x256xbf16>
    %c0_5 = arith.constant 0 : index
    %c0_6 = arith.constant 0 : index
    %c0_7 = arith.constant 0 : index
    %6 = vector.load %arg5[%c0_5, %c0_6, %c0_7] : memref<9x32x3xbf16, #tpu.memory_space<vmem>>, vector<1x32x3xbf16>
    %7 = vector.shape_cast %6 : vector<1x32x3xbf16> to vector<32x3xbf16>
    %cst_8 = arith.constant dense<0.000000e+00> : vector<32x256xf32>
    %8 = tpu.matmul %7, %5, %cst_8 {dimension_numbers = #tpu.dot_dimension_numbers<[1], [0], [0], [1], [0, 0, 1, 1], [], []>} : vector<32x3xbf16>, vector<3x256xbf16>, vector<32x256xf32> -> vector<32x256xf32>
    %9 = arith.addf %0, %8 : vector<32x256xf32>
    %c0_9 = arith.constant 0 : index
    %c0_10 = arith.constant 0 : index
    %c0_11 = arith.constant 0 : index
    %c1 = arith.constant 1 : index
    %10 = vector.load %arg2[%c0_9, %c0_10, %c0_11, %c1] : memref<1x1x3x290xbf16, #tpu.memory_space<vmem>>, vector<1x1x3x256xbf16>
    %11 = vector.shape_cast %10 : vector<1x1x3x256xbf16> to vector<3x256xbf16>
    %c1_12 = arith.constant 1 : index
    %c0_13 = arith.constant 0 : index
    %c0_14 = arith.constant 0 : index
    %12 = vector.load %arg5[%c1_12, %c0_13, %c0_14] : memref<9x32x3xbf16, #tpu.memory_space<vmem>>, vector<1x32x3xbf16>
    %13 = vector.shape_cast %12 : vector<1x32x3xbf16> to vector<32x3xbf16>
    %cst_15 = arith.constant dense<0.000000e+00> : vector<32x256xf32>
    %14 = tpu.matmul %13, %11, %cst_15 {dimension_numbers = #tpu.dot_dimension_numbers<[1], [0], [0], [1], [0, 0, 1, 1], [], []>} : vector<32x3xbf16>, vector<3x256xbf16>, vector<32x256xf32> -> vector<32x256xf32>
    %15 = arith.addf %9, %14 : vector<32x256xf32>
    %c0_16 = arith.constant 0 : index
    %c0_17 = arith.constant 0 : index
    %c0_18 = arith.constant 0 : index
    %c2 = arith.constant 2 : index
    %16 = vector.load %arg2[%c0_16, %c0_17, %c0_18, %c2] : memref<1x1x3x290xbf16, #tpu.memory_space<vmem>>, vector<1x1x3x256xbf16>
    %17 = vector.shape_cast %16 : vector<1x1x3x256xbf16> to vector<3x256xbf16>
    %c0_19 = arith.constant 0 : index
    %c0_20 = arith.constant 0 : index
    %18 = vector.load %arg4[%c0_19, %c0_20] : memref<1x256xbf16, #tpu.memory_space<vmem>>, vector<1x256xbf16>
    %19 = vector.broadcast %18 : vector<1x256xbf16> to vector<3x256xbf16>
    %20 = arith.mulf %17, %19 : vector<3x256xbf16>
    %c2_21 = arith.constant 2 : index
    %c0_22 = arith.constant 0 : index
    %c0_23 = arith.constant 0 : index
    %21 = vector.load %arg5[%c2_21, %c0_22, %c0_23] : memref<9x32x3xbf16, #tpu.memory_space<vmem>>, vector<1x32x3xbf16>
    %22 = vector.shape_cast %21 : vector<1x32x3xbf16> to vector<32x3xbf16>
    %cst_24 = arith.constant dense<0.000000e+00> : vector<32x256xf32>
    %23 = tpu.matmul %22, %20, %cst_24 {dimension_numbers = #tpu.dot_dimension_numbers<[1], [0], [0], [1], [0, 0, 1, 1], [], []>} : vector<32x3xbf16>, vector<3x256xbf16>, vector<32x256xf32> -> vector<32x256xf32>
    %24 = arith.addf %15, %23 : vector<32x256xf32>
    %c0_25 = arith.constant 0 : index
    %c0_26 = arith.constant 0 : index
    %c0_27 = arith.constant 0 : index
    %c16 = arith.constant 16 : index
    %25 = vector.load %arg2[%c0_25, %c0_26, %c0_27, %c16] : memref<1x1x3x290xbf16, #tpu.memory_space<vmem>>, vector<1x1x3x256xbf16>
    %26 = vector.shape_cast %25 : vector<1x1x3x256xbf16> to vector<3x256xbf16>
    %c0_28 = arith.constant 0 : index
    %c0_29 = arith.constant 0 : index
    %27 = vector.load %arg3[%c0_28, %c0_29] : memref<1x256xbf16, #tpu.memory_space<vmem>>, vector<1x256xbf16>
    %28 = vector.broadcast %27 : vector<1x256xbf16> to vector<3x256xbf16>
    %29 = arith.mulf %26, %28 : vector<3x256xbf16>
    %c3 = arith.constant 3 : index
    %c0_30 = arith.constant 0 : index
    %c0_31 = arith.constant 0 : index
    %30 = vector.load %arg5[%c3, %c0_30, %c0_31] : memref<9x32x3xbf16, #tpu.memory_space<vmem>>, vector<1x32x3xbf16>
    %31 = vector.shape_cast %30 : vector<1x32x3xbf16> to vector<32x3xbf16>
    %cst_32 = arith.constant dense<0.000000e+00> : vector<32x256xf32>
    %32 = tpu.matmul %31, %29, %cst_32 {dimension_numbers = #tpu.dot_dimension_numbers<[1], [0], [0], [1], [0, 0, 1, 1], [], []>} : vector<32x3xbf16>, vector<3x256xbf16>, vector<32x256xf32> -> vector<32x256xf32>
    %33 = arith.addf %24, %32 : vector<32x256xf32>
    %c0_33 = arith.constant 0 : index
    %c0_34 = arith.constant 0 : index
    %c0_35 = arith.constant 0 : index
    %c17 = arith.constant 17 : index
    %34 = vector.load %arg2[%c0_33, %c0_34, %c0_35, %c17] : memref<1x1x3x290xbf16, #tpu.memory_space<vmem>>, vector<1x1x3x256xbf16>
    %35 = vector.shape_cast %34 : vector<1x1x3x256xbf16> to vector<3x256xbf16>
    %c4 = arith.constant 4 : index
    %c0_36 = arith.constant 0 : index
    %c0_37 = arith.constant 0 : index
    %36 = vector.load %arg5[%c4, %c0_36, %c0_37] : memref<9x32x3xbf16, #tpu.memory_space<vmem>>, vector<1x32x3xbf16>
    %37 = vector.shape_cast %36 : vector<1x32x3xbf16> to vector<32x3xbf16>
    %cst_38 = arith.constant dense<0.000000e+00> : vector<32x256xf32>
    %38 = tpu.matmul %37, %35, %cst_38 {dimension_numbers = #tpu.dot_dimension_numbers<[1], [0], [0], [1], [0, 0, 1, 1], [], []>} : vector<32x3xbf16>, vector<3x256xbf16>, vector<32x256xf32> -> vector<32x256xf32>
    %39 = arith.addf %33, %38 : vector<32x256xf32>
    %c0_39 = arith.constant 0 : index
    %c0_40 = arith.constant 0 : index
    %c0_41 = arith.constant 0 : index
    %c18 = arith.constant 18 : index
    %40 = vector.load %arg2[%c0_39, %c0_40, %c0_41, %c18] : memref<1x1x3x290xbf16, #tpu.memory_space<vmem>>, vector<1x1x3x256xbf16>
    %41 = vector.shape_cast %40 : vector<1x1x3x256xbf16> to vector<3x256xbf16>
    %c0_42 = arith.constant 0 : index
    %c0_43 = arith.constant 0 : index
    %42 = vector.load %arg4[%c0_42, %c0_43] : memref<1x256xbf16, #tpu.memory_space<vmem>>, vector<1x256xbf16>
    %43 = vector.broadcast %42 : vector<1x256xbf16> to vector<3x256xbf16>
    %44 = arith.mulf %41, %43 : vector<3x256xbf16>
    %c5 = arith.constant 5 : index
    %c0_44 = arith.constant 0 : index
    %c0_45 = arith.constant 0 : index
    %45 = vector.load %arg5[%c5, %c0_44, %c0_45] : memref<9x32x3xbf16, #tpu.memory_space<vmem>>, vector<1x32x3xbf16>
    %46 = vector.shape_cast %45 : vector<1x32x3xbf16> to vector<32x3xbf16>
    %cst_46 = arith.constant dense<0.000000e+00> : vector<32x256xf32>
    %47 = tpu.matmul %46, %44, %cst_46 {dimension_numbers = #tpu.dot_dimension_numbers<[1], [0], [0], [1], [0, 0, 1, 1], [], []>} : vector<32x3xbf16>, vector<3x256xbf16>, vector<32x256xf32> -> vector<32x256xf32>
    %48 = arith.addf %39, %47 : vector<32x256xf32>
    %c0_47 = arith.constant 0 : index
    %c0_48 = arith.constant 0 : index
    %c0_49 = arith.constant 0 : index
    %c32 = arith.constant 32 : index
    %49 = vector.load %arg2[%c0_47, %c0_48, %c0_49, %c32] : memref<1x1x3x290xbf16, #tpu.memory_space<vmem>>, vector<1x1x3x256xbf16>
    %50 = vector.shape_cast %49 : vector<1x1x3x256xbf16> to vector<3x256xbf16>
    %c0_50 = arith.constant 0 : index
    %c0_51 = arith.constant 0 : index
    %51 = vector.load %arg3[%c0_50, %c0_51] : memref<1x256xbf16, #tpu.memory_space<vmem>>, vector<1x256xbf16>
    %52 = vector.broadcast %51 : vector<1x256xbf16> to vector<3x256xbf16>
    %53 = arith.mulf %50, %52 : vector<3x256xbf16>
    %c6 = arith.constant 6 : index
    %c0_52 = arith.constant 0 : index
    %c0_53 = arith.constant 0 : index
    %54 = vector.load %arg5[%c6, %c0_52, %c0_53] : memref<9x32x3xbf16, #tpu.memory_space<vmem>>, vector<1x32x3xbf16>
    %55 = vector.shape_cast %54 : vector<1x32x3xbf16> to vector<32x3xbf16>
    %cst_54 = arith.constant dense<0.000000e+00> : vector<32x256xf32>
    %56 = tpu.matmul %55, %53, %cst_54 {dimension_numbers = #tpu.dot_dimension_numbers<[1], [0], [0], [1], [0, 0, 1, 1], [], []>} : vector<32x3xbf16>, vector<3x256xbf16>, vector<32x256xf32> -> vector<32x256xf32>
    %57 = arith.addf %48, %56 : vector<32x256xf32>
    %c0_55 = arith.constant 0 : index
    %c0_56 = arith.constant 0 : index
    %c0_57 = arith.constant 0 : index
    %c33 = arith.constant 33 : index
    %58 = vector.load %arg2[%c0_55, %c0_56, %c0_57, %c33] : memref<1x1x3x290xbf16, #tpu.memory_space<vmem>>, vector<1x1x3x256xbf16>
    %59 = vector.shape_cast %58 : vector<1x1x3x256xbf16> to vector<3x256xbf16>
    %c7 = arith.constant 7 : index
    %c0_58 = arith.constant 0 : index
    %c0_59 = arith.constant 0 : index
    %60 = vector.load %arg5[%c7, %c0_58, %c0_59] : memref<9x32x3xbf16, #tpu.memory_space<vmem>>, vector<1x32x3xbf16>
    %61 = vector.shape_cast %60 : vector<1x32x3xbf16> to vector<32x3xbf16>
    %cst_60 = arith.constant dense<0.000000e+00> : vector<32x256xf32>
    %62 = tpu.matmul %61, %59, %cst_60 {dimension_numbers = #tpu.dot_dimension_numbers<[1], [0], [0], [1], [0, 0, 1, 1], [], []>} : vector<32x3xbf16>, vector<3x256xbf16>, vector<32x256xf32> -> vector<32x256xf32>
    %63 = arith.addf %57, %62 : vector<32x256xf32>
    %c0_61 = arith.constant 0 : index
    %c0_62 = arith.constant 0 : index
    %c0_63 = arith.constant 0 : index
    %c34 = arith.constant 34 : index
    %64 = vector.load %arg2[%c0_61, %c0_62, %c0_63, %c34] : memref<1x1x3x290xbf16, #tpu.memory_space<vmem>>, vector<1x1x3x256xbf16>
    %65 = vector.shape_cast %64 : vector<1x1x3x256xbf16> to vector<3x256xbf16>
    %c0_64 = arith.constant 0 : index
    %c0_65 = arith.constant 0 : index
    %66 = vector.load %arg4[%c0_64, %c0_65] : memref<1x256xbf16, #tpu.memory_space<vmem>>, vector<1x256xbf16>
    %67 = vector.broadcast %66 : vector<1x256xbf16> to vector<3x256xbf16>
    %68 = arith.mulf %65, %67 : vector<3x256xbf16>
    %c8 = arith.constant 8 : index
    %c0_66 = arith.constant 0 : index
    %c0_67 = arith.constant 0 : index
    %69 = vector.load %arg5[%c8, %c0_66, %c0_67] : memref<9x32x3xbf16, #tpu.memory_space<vmem>>, vector<1x32x3xbf16>
    %70 = vector.shape_cast %69 : vector<1x32x3xbf16> to vector<32x3xbf16>
    %cst_68 = arith.constant dense<0.000000e+00> : vector<32x256xf32>
    %71 = tpu.matmul %70, %68, %cst_68 {dimension_numbers = #tpu.dot_dimension_numbers<[1], [0], [0], [1], [0, 0, 1, 1], [], []>} : vector<32x3xbf16>, vector<3x256xbf16>, vector<32x256xf32> -> vector<32x256xf32>
    %72 = arith.addf %63, %71 : vector<32x256xf32>
    %c0_69 = arith.constant 0 : index
    %c0_70 = arith.constant 0 : index
    %73 = vector.load %arg6[%c0_69, %c0_70] : memref<32x1xf32, #tpu.memory_space<vmem>>, vector<32x1xf32>
    %74 = vector.broadcast %73 : vector<32x1xf32> to vector<32x256xf32>
    %75 = arith.addf %72, %74 : vector<32x256xf32>
    %76 = arith.negf %75 : vector<32x256xf32>
    %77 = math.exp %76 : vector<32x256xf32>
    %cst_71 = arith.constant 1.000000e+00 : f32
    %78 = vector.broadcast %cst_71 : f32 to vector<32x256xf32>
    %79 = arith.addf %78, %77 : vector<32x256xf32>
    %80 = arith.divf %78, %79 : vector<32x256xf32>
    %81 = arith.mulf %75, %80 : vector<32x256xf32>
    %c0_72 = arith.constant 0 : index
    %c0_73 = arith.constant 0 : index
    %82 = vector.load %arg7[%c0_72, %c0_73] : memref<24x32xbf16, #tpu.memory_space<vmem>>, vector<24x32xbf16>
    %83 = arith.truncf %81 : vector<32x256xf32> to vector<32x256xbf16>
    %cst_74 = arith.constant dense<0.000000e+00> : vector<24x256xf32>
    %84 = tpu.matmul %82, %83, %cst_74 {dimension_numbers = #tpu.dot_dimension_numbers<[1], [0], [0], [1], [0, 0, 1, 1], [], []>} : vector<24x32xbf16>, vector<32x256xbf16>, vector<24x256xf32> -> vector<24x256xf32>
    %c0_75 = arith.constant 0 : index
    %c0_76 = arith.constant 0 : index
    %85 = vector.load %arg8[%c0_75, %c0_76] : memref<24x1xf32, #tpu.memory_space<vmem>>, vector<24x1xf32>
    %86 = vector.broadcast %85 : vector<24x1xf32> to vector<24x256xf32>
    %87 = arith.addf %84, %86 : vector<24x256xf32>
    %c0_77 = arith.constant 0 : index
    %c0_78 = arith.constant 0 : index
    %c0_79 = arith.constant 0 : index
    %c0_80 = arith.constant 0 : index
    %88 = vector.load %arg9[%c0_77, %c0_78, %c0_79, %c0_80] : memref<1x1x24x256xf32, #tpu.memory_space<vmem>>, vector<1x1x24x256xf32>
    %89 = vector.shape_cast %88 : vector<1x1x24x256xf32> to vector<24x256xf32>
    %90 = vector.shape_cast %87 : vector<24x256xf32> to vector<1x1x24x256xf32>
    tpu.vector_store %arg9[%c0_77, %c0_78, %c0_79, %c0_80], %90 {strides = array<i32>} : memref<1x1x24x256xf32, #tpu.memory_space<vmem>>, vector<1x1x24x256xf32>,
    return
  }
  func.func @transform_0(%arg0: i32, %arg1: i32) -> (i32, i32, i32, i32) {
    %c0_i32 = arith.constant 0 : i32
    %c0_i32_0 = arith.constant 0 : i32
    %c0_i32_1 = arith.constant 0 : i32
    return %arg0, %arg1, %c0_i32, %c0_i32_0 : i32, i32, i32, i32
  }
  func.func @transform_1(%arg0: i32, %arg1: i32) -> (i32, i32) {
    %c0_i32 = arith.constant 0 : i32
    %c0_i32_0 = arith.constant 0 : i32
    %c0_i32_1 = arith.constant 0 : i32
    return %c0_i32, %c0_i32_0 : i32, i32
  }
  func.func @transform_2(%arg0: i32, %arg1: i32) -> (i32, i32) {
    %c0_i32 = arith.constant 0 : i32
    %c0_i32_0 = arith.constant 0 : i32
    %c0_i32_1 = arith.constant 0 : i32
    return %c0_i32, %c0_i32_0 : i32, i32
  }
  func.func @transform_3(%arg0: i32, %arg1: i32) -> (i32, i32, i32) {
    %c0_i32 = arith.constant 0 : i32
    %c0_i32_0 = arith.constant 0 : i32
    %c0_i32_1 = arith.constant 0 : i32
    %c0_i32_2 = arith.constant 0 : i32
    return %c0_i32, %c0_i32_0, %c0_i32_1 : i32, i32, i32
  }
  func.func @transform_4(%arg0: i32, %arg1: i32) -> (i32, i32) {
    %c0_i32 = arith.constant 0 : i32
    %c0_i32_0 = arith.constant 0 : i32
    %c0_i32_1 = arith.constant 0 : i32
    return %c0_i32, %c0_i32_0 : i32, i32
  }
  func.func @transform_5(%arg0: i32, %arg1: i32) -> (i32, i32) {
    %c0_i32 = arith.constant 0 : i32
    %c0_i32_0 = arith.constant 0 : i32
    %c0_i32_1 = arith.constant 0 : i32
    return %c0_i32, %c0_i32_0 : i32, i32
  }
  func.func @transform_6(%arg0: i32, %arg1: i32) -> (i32, i32) {
    %c0_i32 = arith.constant 0 : i32
    %c0_i32_0 = arith.constant 0 : i32
    %c0_i32_1 = arith.constant 0 : i32
    return %c0_i32, %c0_i32_0 : i32, i32
  }
  func.func @transform_7(%arg0: i32, %arg1: i32) -> (i32, i32, i32, i32) {
    %c0_i32 = arith.constant 0 : i32
    %c0_i32_0 = arith.constant 0 : i32
    %c0_i32_1 = arith.constant 0 : i32
    return %arg0, %arg1, %c0_i32, %c0_i32_0 : i32, i32, i32, i32
  }
}

</mosaic_0001>

<llo_original>
// kernel: tpu_custom_call.1
$region0: #{tpu_custom_call.1}
  #allocation0 [shape = 'u32[]', space=smem, size = 0x4, offset = 0x4, fixed_abs, tag = 'smem constant byte address 0x4 - core index']
  #allocation1 [shape = 'u32[144,128]{1,0:T(1,128)}', space=vmem, size = 0x12000, scoped, tag = 'internal scratch']
  %s0 = inlined_call_operand.vmem [shape: bf16[2,1,3,290], index: 0, kind: input, shape index: {}]
  %s1 = inlined_call_operand.vmem [shape: bf16[1,256], index: 1, kind: input, shape index: {}]
  %s2 = inlined_call_operand.vmem [shape: bf16[1,256], index: 2, kind: input, shape index: {}]
  %s3 = inlined_call_operand.vmem [shape: bf16[9,32,3], index: 3, kind: input, shape index: {}]
  %s4 = inlined_call_operand.vmem [shape: f32[32,1], index: 4, kind: input, shape index: {}]
  %s5 = inlined_call_operand.vmem [shape: bf16[24,32], index: 5, kind: input, shape index: {}]
  %s6 = inlined_call_operand.vmem [shape: f32[24,1], index: 6, kind: input, shape index: {}]
  %s7 = inlined_call_operand.hbm [shape: f32[2,1,24,256], index: 7, kind: output, shape index: {}]
  %s8 = sld [smem:[#allocation0]]
  $region61: #{tpu_custom_call.1} parent=0
    _
  %s10 = ssub.s32 1, %s8
  %s11 = scalar_select 0, %s10, %s8
  $region1: #{tpu_custom_call.1} parent=0
    #allocation2 [shape = 'u8[49152]{0}', space=vmem, size = 0xc000, scoped, tag = 'output window, operand 0']
    #allocation3 [shape = 's32[2]{0}', space=sflag, size = 0x8, scoped, tag = 'scoped memory for tpu_custom_call.1']
    %12 = vsyncpa [#allocation3], 0
    %s13 = scalar_lea.sflag [#allocation3], 1
    %14 = vsyncpa %s13, 0
    loop: start=0, step=1, limit=4
    $region2: #{tpu_custom_call.1} parent=1 // loop_pre_header
      _
    $region3: #{tpu_custom_call.1} parent=1 // loop_header
      %s16 = sphi 0, %s20
      %p17 = scmp.ge.s32.totalorder %s16, 4
      %s23 = sphi 0, %s35
      %s24 = sphi 0, %s31
      %s25 = sphi 0, %s23
      %s26 = sphi 0, %s24
      %s27 = sphi 0, %s25
      %s28 = sphi 0, %s26
      %s40 = sphi 0, %s42
      %s43 = sphi 0, %s40
      %s44 = sphi 0, %s43
      %s60 = sphi 0, %s44
      %s64 = sphi 0, %s64
      %s66 = sphi 0, %s64
      %s67 = sphi 0, %s66
      %s81 = sphi 0, %s67
      %s85 = sphi 0, %s85
      %s87 = sphi 0, %s85
      %s88 = sphi 0, %s87
      %s102 = sphi 0, %s88
      %s106 = sphi 0, %s106
      %s108 = sphi 0, %s106
      %s109 = sphi 0, %s108
      %s123 = sphi 0, %s109
      %s127 = sphi 0, %s127
      %s129 = sphi 0, %s127
      %s130 = sphi 0, %s129
      %s144 = sphi 0, %s130
      %s148 = sphi 0, %s148
      %s150 = sphi 0, %s148
      %s151 = sphi 0, %s150
      %s165 = sphi 0, %s151
      %s169 = sphi 0, %s169
      %s171 = sphi 0, %s169
      %s172 = sphi 0, %s171
      %s186 = sphi 0, %s172
      %s194 = sphi 0, %s196
      %s197 = sphi 0, %s194
      %s198 = sphi 0, %s197
      %s214 = sphi 0, %s198
    $region4: #{tpu_custom_call.1} parent=1 // loop_header_branch
      %19 = sbr.rel (%p17) target = $region8
    $region5: #{tpu_custom_call.1} parent=1 // loop_body
      %s21 = ssub.s32 %s16, 1
      %s22 = ssub.s32 %s16, 2
      %s29 = sadd.s32 1, %s24
      %p30 = scmp.ge.s32.totalorder %s29, 1
      %s31 = scalar_select %p30, 0, %s29
      %s32 = sadd.s32 1, %s23
      %s33 = scalar_select %p30, %s32, %s23
      %p34 = scmp.ge.s32.totalorder %s33, 2
      %s35 = scalar_select %p34, 0, %s33
      %s36 = ssub.s32 %s23, %s35
      %s37 = ssub.s32 %s24, %s31
      %s38 = sor.u32 %s36, %s37
      %p39 = scmp.eq.s32.totalorder %s38, 0
      %s41 = sadd.s32 %s40, 1
      %s42 = scalar_select %p39, %s40, %s41
      %p45 = pneg %p39
      %p46 = scmp.eq.s32.totalorder %s16, 1
      %p47 = por %p45, %p46
      %p48 = scmp.ne.s32.totalorder %s40, %s43
      %p49 = scmp.eq.s32.totalorder %s16, 0
      %p50 = por %p48, %p49
      %p51 = scmp.ne.s32.totalorder %s40, %s43
      %p52 = scmp.eq.s32.totalorder %s21, 1
      %p53 = por %p51, %p52
      %p54 = scmp.ne.s32.totalorder %s43, %s44
      %p55 = scmp.eq.s32.totalorder %s21, 0
      %p56 = por %p54, %p55
      %p57 = scmp.ne.s32.totalorder %s43, %s44
      %p58 = scmp.eq.s32.totalorder %s22, 1
      %p59 = por %p57, %p58
      %p61 = scmp.ne.s32.totalorder %s44, %s60
      %p62 = scmp.eq.s32.totalorder %s22, 0
      %p63 = por %p61, %p62
      %s65 = sadd.s32 %s64, 1
      %p68 = scmp.eq.s32.totalorder %s16, 1
      %p69 = scmp.ne.s32.totalorder %s64, %s66
      %p70 = scmp.eq.s32.totalorder %s16, 0
      %p71 = por %p69, %p70
      %p72 = scmp.ne.s32.totalorder %s64, %s66
      %p73 = scmp.eq.s32.totalorder %s21, 1
      %p74 = por %p72, %p73
      %p75 = scmp.ne.s32.totalorder %s66, %s67
      %p76 = scmp.eq.s32.totalorder %s21, 0
      %p77 = por %p75, %p76
      %p78 = scmp.ne.s32.totalorder %s66, %s67
      %p79 = scmp.eq.s32.totalorder %s22, 1
      %p80 = por %p78, %p79
      %p82 = scmp.ne.s32.totalorder %s67, %s81
      %p83 = scmp.eq.s32.totalorder %s22, 0
      %p84 = por %p82, %p83
      %s86 = sadd.s32 %s85, 1
      %p89 = scmp.eq.s32.totalorder %s16, 1
      %p90 = scmp.ne.s32.totalorder %s85, %s87
      %p91 = scmp.eq.s32.totalorder %s16, 0
      %p92 = por %p90, %p91
      %p93 = scmp.ne.s32.totalorder %s85, %s87
      %p94 = scmp.eq.s32.totalorder %s21, 1
      %p95 = por %p93, %p94
      %p96 = scmp.ne.s32.totalorder %s87, %s88
      %p97 = scmp.eq.s32.totalorder %s21, 0
      %p98 = por %p96, %p97
      %p99 = scmp.ne.s32.totalorder %s87, %s88
      %p100 = scmp.eq.s32.totalorder %s22, 1
      %p101 = por %p99, %p100
      %p103 = scmp.ne.s32.totalorder %s88, %s102
      %p104 = scmp.eq.s32.totalorder %s22, 0
      %p105 = por %p103, %p104
      %s107 = sadd.s32 %s106, 1
      %p110 = scmp.eq.s32.totalorder %s16, 1
      %p111 = scmp.ne.s32.totalorder %s106, %s108
      %p112 = scmp.eq.s32.totalorder %s16, 0
      %p113 = por %p111, %p112
      %p114 = scmp.ne.s32.totalorder %s106, %s108
      %p115 = scmp.eq.s32.totalorder %s21, 1
      %p116 = por %p114, %p115
      %p117 = scmp.ne.s32.totalorder %s108, %s109
      %p118 = scmp.eq.s32.totalorder %s21, 0
      %p119 = por %p117, %p118
      %p120 = scmp.ne.s32.totalorder %s108, %s109
      %p121 = scmp.eq.s32.totalorder %s22, 1
      %p122 = por %p120, %p121
      %p124 = scmp.ne.s32.totalorder %s109, %s123
      %p125 = scmp.eq.s32.totalorder %s22, 0
      %p126 = por %p124, %p125
      %s128 = sadd.s32 %s127, 1
      %p131 = scmp.eq.s32.totalorder %s16, 1
      %p132 = scmp.ne.s32.totalorder %s127, %s129
      %p133 = scmp.eq.s32.totalorder %s16, 0
      %p134 = por %p132, %p133
      %p135 = scmp.ne.s32.totalorder %s127, %s129
      %p136 = scmp.eq.s32.totalorder %s21, 1
      %p137 = por %p135, %p136
      %p138 = scmp.ne.s32.totalorder %s129, %s130
      %p139 = scmp.eq.s32.totalorder %s21, 0
      %p140 = por %p138, %p139
      %p141 = scmp.ne.s32.totalorder %s129, %s130
      %p142 = scmp.eq.s32.totalorder %s22, 1
      %p143 = por %p141, %p142
      %p145 = scmp.ne.s32.totalorder %s130, %s144
      %p146 = scmp.eq.s32.totalorder %s22, 0
      %p147 = por %p145, %p146
      %s149 = sadd.s32 %s148, 1
      %p152 = scmp.eq.s32.totalorder %s16, 1
      %p153 = scmp.ne.s32.totalorder %s148, %s150
      %p154 = scmp.eq.s32.totalorder %s16, 0
      %p155 = por %p153, %p154
      %p156 = scmp.ne.s32.totalorder %s148, %s150
      %p157 = scmp.eq.s32.totalorder %s21, 1
      %p158 = por %p156, %p157
      %p159 = scmp.ne.s32.totalorder %s150, %s151
      %p160 = scmp.eq.s32.totalorder %s21, 0
      %p161 = por %p159, %p160
      %p162 = scmp.ne.s32.totalorder %s150, %s151
      %p163 = scmp.eq.s32.totalorder %s22, 1
      %p164 = por %p162, %p163
      %p166 = scmp.ne.s32.totalorder %s151, %s165
      %p167 = scmp.eq.s32.totalorder %s22, 0
      %p168 = por %p166, %p167
      %s170 = sadd.s32 %s169, 1
      %p173 = scmp.eq.s32.totalorder %s16, 1
      %p174 = scmp.ne.s32.totalorder %s169, %s171
      %p175 = scmp.eq.s32.totalorder %s16, 0
      %p176 = por %p174, %p175
      %p177 = scmp.ne.s32.totalorder %s169, %s171
      %p178 = scmp.eq.s32.totalorder %s21, 1
      %p179 = por %p177, %p178
      %p180 = scmp.ne.s32.totalorder %s171, %s172
      %p181 = scmp.eq.s32.totalorder %s21, 0
      %p182 = por %p180, %p181
      %p183 = scmp.ne.s32.totalorder %s171, %s172
      %p184 = scmp.eq.s32.totalorder %s22, 1
      %p185 = por %p183, %p184
      %p187 = scmp.ne.s32.totalorder %s172, %s186
      %p188 = scmp.eq.s32.totalorder %s22, 0
      %p189 = por %p187, %p188
      %s190 = ssub.s32 %s23, %s35
      %s191 = ssub.s32 %s24, %s31
      %s192 = sor.u32 %s190, %s191
      %p193 = scmp.eq.s32.totalorder %s192, 0
      %s195 = sadd.s32 %s194, 1
      %s196 = scalar_select %p193, %s194, %s195
      %p199 = pneg %p193
      %p200 = scmp.eq.s32.totalorder %s16, 1
      %p201 = por %p199, %p200
      %p202 = scmp.ne.s32.totalorder %s194, %s197
      %p203 = scmp.eq.s32.totalorder %s16, 0
      %p204 = por %p202, %p203
      %p205 = scmp.ne.s32.totalorder %s194, %s197
      %p206 = scmp.eq.s32.totalorder %s21, 1
      %p207 = por %p205, %p206
      %p208 = scmp.ne.s32.totalorder %s197, %s198
      %p209 = scmp.eq.s32.totalorder %s21, 0
      %p210 = por %p208, %p209
      %p211 = scmp.ne.s32.totalorder %s197, %s198
      %p212 = scmp.eq.s32.totalorder %s22, 1
      %p213 = por %p211, %p212
      %p215 = scmp.ne.s32.totalorder %s198, %s214
      %p216 = scmp.eq.s32.totalorder %s22, 0
      %p217 = por %p215, %p216
      %p218 = scmp.le.s32.totalorder 1, %s16
      %p219 = scmp.lt.s32.totalorder %s16, 3
      %p220 = pnand %p218, %p219
      %p221 = pneg %p220
      // Predicated region
      $region9: #{tpu_custom_call.1} parent=5 // pred_check
        _
      $region10: #{tpu_custom_call.1} parent=5 // pred_check_branch
        %223 = sbr.rel (%p220) target = $region12
      $region11: #{tpu_custom_call.1} parent=5 // pred_region
        %s224 = ssub.s32 %s16, 1
        // Predicated region
        $region13: #{tpu_custom_call.1} parent=11 // pred_check
          %p225 = pneg %p77
        $region14: #{tpu_custom_call.1} parent=11 // pred_check_branch
          %227 = sbr.rel (%p225) target = $region16
        $region15: #{tpu_custom_call.1} parent=11 // pred_region
          _
        $region16: #{tpu_custom_call.1} parent=11 // pred_fallthru
          _
        // Predicated region
        $region17: #{tpu_custom_call.1} parent=11 // pred_check
          %p228 = pneg %p98
        $region18: #{tpu_custom_call.1} parent=11 // pred_check_branch
          %230 = sbr.rel (%p228) target = $region20
        $region19: #{tpu_custom_call.1} parent=11 // pred_region
          _
        $region20: #{tpu_custom_call.1} parent=11 // pred_fallthru
          _
        // Predicated region
        $region21: #{tpu_custom_call.1} parent=11 // pred_check
          %p231 = pneg %p119
        $region22: #{tpu_custom_call.1} parent=11 // pred_check_branch
          %233 = sbr.rel (%p231) target = $region24
        $region23: #{tpu_custom_call.1} parent=11 // pred_region
          _
        $region24: #{tpu_custom_call.1} parent=11 // pred_fallthru
          _
        // Predicated region
        $region25: #{tpu_custom_call.1} parent=11 // pred_check
          %p234 = pneg %p140
        $region26: #{tpu_custom_call.1} parent=11 // pred_check_branch
          %236 = sbr.rel (%p234) target = $region28
        $region27: #{tpu_custom_call.1} parent=11 // pred_region
          _
        $region28: #{tpu_custom_call.1} parent=11 // pred_fallthru
          _
        // Predicated region
        $region29: #{tpu_custom_call.1} parent=11 // pred_check
          %p237 = pneg %p161
        $region30: #{tpu_custom_call.1} parent=11 // pred_check_branch
          %239 = sbr.rel (%p237) target = $region32
        $region31: #{tpu_custom_call.1} parent=11 // pred_region
          _
        $region32: #{tpu_custom_call.1} parent=11 // pred_fallthru
          _
        // Predicated region
        $region33: #{tpu_custom_call.1} parent=11 // pred_check
          %p240 = pneg %p182
        $region34: #{tpu_custom_call.1} parent=11 // pred_check_branch
          %242 = sbr.rel (%p240) target = $region36
        $region35: #{tpu_custom_call.1} parent=11 // pred_region
          _
        $region36: #{tpu_custom_call.1} parent=11 // pred_fallthru
          _
      $region12: #{tpu_custom_call.1} parent=5 // pred_fallthru
        _
      %p243 = scmp.lt.s32.totalorder %s16, 2
      // Predicated region
      $region37: #{tpu_custom_call.1} parent=5 // pred_check
        %p244 = pneg %p243
      $region38: #{tpu_custom_call.1} parent=5 // pred_check_branch
        %246 = sbr.rel (%p244) target = $region40
      $region39: #{tpu_custom_call.1} parent=5 // pred_region
        // Predicated region
        $region41: #{tpu_custom_call.1} parent=39 // pred_check
          %p247 = pneg %p50
        $region42: #{tpu_custom_call.1} parent=39 // pred_check_branch
          %249 = sbr.rel (%p247) target = $region44
        $region43: #{tpu_custom_call.1} parent=39 // pred_region
          %p250 = scmp.lt.s32.totalorder %s23, 1
          %s251 = scalar_select %p250, %s23, 1
          %p252 = scmp.lt.s32.totalorder %s24, 0
          %s253 = scalar_select %p252, %s24, 0
          %s254 = smul.addr %s253, 3
          %s255 = smul.addr %s251, 3
          %s256 = sadd.s32 %s254, %s255
          %s257 = smul.addr %s256, 2
          %s258 = scalar_lea.vmem %s0, %s257
        $region44: #{tpu_custom_call.1} parent=39 // pred_fallthru
          _
      $region40: #{tpu_custom_call.1} parent=5 // pred_fallthru
        _
      %p259 = scmp.le.s32.totalorder 1, %s16
      %p260 = scmp.lt.s32.totalorder %s16, 3
      %p261 = pnand %p259, %p260
      %p262 = pneg %p261
      // Predicated region
      $region45: #{tpu_custom_call.1} parent=5 // pred_check
        _
      $region46: #{tpu_custom_call.1} parent=5 // pred_check_branch
        %264 = sbr.rel (%p261) target = $region48
      $region47: #{tpu_custom_call.1} parent=5 // pred_region
        %s265 = ssub.s32 %s16, 1
        %p266 = scmp.lt.s32.totalorder %s25, 1
        %s267 = scalar_select %p266, %s25, 1
        %p268 = scmp.lt.s32.totalorder %s26, 0
        %s269 = scalar_select %p268, %s26, 0
        %s270 = smul.addr %s269, 3
        %s271 = smul.addr %s267, 3
        %s272 = sadd.s32 %s270, %s271
        %s273 = smul.addr %s272, 2
        %s274 = scalar_lea.vmem %s0, %s273
        %p275 = pneg %p56
        %p276 = pneg %p53
        %p277 = pneg %p77
        %p278 = pneg %p74
        %p279 = pneg %p98
        %p280 = pneg %p95
        %p281 = pneg %p119
        %p282 = pneg %p116
        %p283 = pneg %p140
        %p284 = pneg %p137
        %p285 = pneg %p161
        %p286 = pneg %p158
        %p287 = pneg %p182
        %p288 = pneg %p179
        %p289 = pneg %p210
        %p290 = pneg %p207
        %s291 = sand.u32 %s197, 1
        %s292 = scalar_lea.sflag [#allocation3], %s291
        %s293 = sand.u32 %s197, 1
        %s294 = smul.addr %s293, 48
        %s295 = scalar_lea.vmem [#allocation2], %s294
        %p296 = scmp.lt.s32.totalorder %s25, 1
        %s297 = scalar_select %p296, %s25, 1
        %p298 = scmp.lt.s32.totalorder %s26, 0
        %s299 = scalar_select %p298, %s26, 0
        %s300 = smul.addr %s299, 3
        %s301 = smul.addr %s297, 3
        %s302 = sadd.s32 %s300, %s301
        %s303 = smul.addr %s302, 2
        %s304 = scalar_lea.vmem %s0, %s303
        %v306 = vld [vmem:[%s304] sm:$0xf]
        %v307 = vld [vmem:[%s1] sm:$0x3]
        %v310 = vunpack.c.l.s4 1966171168
        %v311 = vunpack.c.0.s8 %v310
        %v312 = vlaneseq
        %v313 = vshrl.u32 %v312, 7
        %v314 = vsub.s32 %v311, %v313
        %v315 = vrot.slane %v307, %v314
        %v316 = vcombine.high %v315, %v315
        %v318 = vunpack.c.l.s4 1966171168
        %v319 = vunpack.c.0.s8 %v318
        %v320 = vlaneseq
        %v321 = vshrl.u32 %v320, 7
        %v322 = vsub.s32 %v319, %v321
        %v323 = vrot.slane %v315, %v322
        %v325 = vunpack.c.l.s4 1966171168
        %v326 = vunpack.c.0.s8 %v325
        %v327 = vlaneseq
        %v328 = vshrl.u32 %v327, 7
        %v329 = vsub.s32 %v326, %v328
        %v330 = vrot.slane %v316, %v329
        %v332 = vpack.i.b16 %v323, %v323
        %v334 = vlaneseq
        %v335 = vshrl.u32 %v334, 7
        %v336 = vsub.s32 0, %v335
        %v337 = vrot.slane %v332, %v336
        %v339 = vpack.i.b16 %v330, %v330
        %v341 = vlaneseq
        %v342 = vshrl.u32 %v341, 7
        %v343 = vsub.s32 0, %v342
        %v344 = vrot.slane %v339, %v343
        %v347 = vcombine.low %v337, %v344
        %v349 = vunpack.c.l.s4 1983009808
        %v350 = vunpack.c.0.s8 %v349
        %v351 = vlaneseq
        %v352 = vshrl.u32 %v351, 7
        %v353 = vsub.s32 %v350, %v352
        %v354 = vrot.slane %v347, %v353
        %v356 = vmul.bf16 %v306, %v354
        %v357 = vld [vmem:[%s3] sm:$0xf]
        %v358 = vld [vmem:[%s3 + $0x4] sm:$0xf]
        %v359 = vld [vmem:[%s3 + $0x8] sm:$0xf]
        %v360 = vld [vmem:[%s3 + $0xc] sm:$0xf]
        %v361 = vld [vmem:[%s304] sm:$0x3f]
        %s362 = scalar_lea.vmem %s3, 16
        %v363 = vld [vmem:[%s362] sm:$0xf]
        %v364 = vld [vmem:[%s362 + $0x4] sm:$0xf]
        %v365 = vld [vmem:[%s362 + $0x8] sm:$0xf]
        %v366 = vld [vmem:[%s362 + $0xc] sm:$0xf]
        %v371 = vunpack.c.l.b16 %v363
        %v372 = vunpack.c.l.b16 %v364
        %v373 = vunpack.c.l.b16 %v365
        %v374 = vunpack.c.l.b16 %v366
        %v375 = vpack.c.b16 %v372, %v371
        %v376 = vpack.c.b16 %v374, %v373
        %v378 = vcombine.high %v361, %v361
        %v380 = vunpack.c.l.s4 1983009808
        %v381 = vunpack.c.0.s8 %v380
        %v382 = vlaneseq
        %v383 = vshrl.u32 %v382, 7
        %v384 = vsub.s32 %v381, %v383
        %v385 = vrot.slane %v361, %v384
        %v387 = vunpack.c.l.s4 1983009808
        %v388 = vunpack.c.0.s8 %v387
        %v389 = vlaneseq
        %v390 = vshrl.u32 %v389, 7
        %v391 = vsub.s32 %v388, %v390
        %v392 = vrot.slane %v378, %v391
        %v393 = vcombine.high %v385, %v385
        %394 = vrot.lane.b32.xlu0 %v385, 127
        %v395 = vpop.permute.xlu0 %394
        %396 = vrot.lane.b32.xlu0 %v393, 127
        %v397 = vpop.permute.xlu0 %396
        %398 = vrot.lane.b32.xlu0 %v392, 127
        %v399 = vpop.permute.xlu0 %398
        %vm400 = vcmask 1039360
        %v401 = vsel %vm400, %v395, %v397
        %v402 = vsel %vm400, %v397, %v399
        %vm403 = vcmask 23552
        %v405 = vsel %vm403, %v375, 0
        %v408 = vsel %vm403, %v376, 0
        %vm410 = vcmask 1040384
        %vm411 = vcmask 1041408
        %v412 = vsel %vm410, 4294967295, 65535
        %v413 = vsel %vm411, %v412, 0
        %v415 = vand.u32 %v401, %v413
        %v418 = vand.u32 %v402, %v413
        %420 = vmatprep.subr.bf16.mxu0 0
        %421 = vmatpush1.bf16.msra.mxu0 0
        %422 = vmatprep.subr.bf16.mxu0 0
        %423 = vmatpush1.bf16.msra.mxu0 0
        %424 = vmatprep.subr.bf16.mxu0 0
        %425 = vmatpush1.bf16.msra.mxu0 0
        %426 = vmatprep.subr.bf16.mxu0 0
        %427 = vmatpush1.bf16.msra.mxu0 0
        %428 = vmatprep.subr.bf16.mxu0 0
        %429 = vmatpush1.bf16.msra.mxu0 0
        %430 = vmatprep.subr.bf16.mxu0 0
        %431 = vmatpush1.bf16.msra.mxu0 0
        %432 = vmatprep.subr.bf16.mxu0 0
        %433 = vmatpush1.bf16.msra.mxu0 0
        %434 = vmatprep.subr.bf16.mxu0 %v418
        %435 = vmatpush1.bf16.msra.mxu0 %v415
        %436 = vmatprep.subr.bf16.mxu0 0
        %437 = vmatpush2.bf16.msra.mxu0 0
        %438 = vmatprep.subr.bf16.mxu0 0
        %439 = vmatpush2.bf16.msra.mxu0 0
        %440 = vmatprep.subr.bf16.mxu0 0
        %441 = vmatpush2.bf16.msra.mxu0 0
        %442 = vmatprep.subr.bf16.mxu0 0
        %443 = vmatpush2.bf16.msra.mxu0 0
        %444 = vmatprep.subr.bf16.mxu0 0
        %445 = vmatpush2.bf16.msra.mxu0 0
        %446 = vmatprep.subr.bf16.mxu0 0
        %447 = vmatpush2.bf16.msra.mxu0 0
        %448 = vmatprep.subr.bf16.mxu0 0
        %449 = vmatpush2.bf16.msra.mxu0 0
        %450 = vmatprep.subr.bf16.mxu0 0
        %451 = vmatpush2.bf16.msra.mxu0 0
        %452 = vmatprep.mubr.bf16.mxu0 0
        %453 = vmatmul.mubr.bf16.gmra.mxu0 %v405
        %v454 = vpop.f32.mrf.mxu0
        %v455 = vadd.f32 0.0, %v454
        %v456 = vpop.f32.mrf.mxu0
        %v457 = vadd.f32 0.0, %v456
        %v458 = vpop.f32.mrf.mxu0
        %v459 = vadd.f32 0.0, %v458
        %v460 = vpop.f32.mrf.mxu0
        %v461 = vadd.f32 0.0, %v460
        %462 = vmatprep.mubr.bf16.mxu0 0
        %463 = vmatmul.mubr.bf16.gmra.mxu0 %v408
        %v464 = vpop.f32.mrf.mxu0
        %v465 = vadd.f32 0.0, %v464
        %v466 = vpop.f32.mrf.mxu0
        %v467 = vadd.f32 0.0, %v466
        %v468 = vpop.f32.mrf.mxu0
        %v469 = vadd.f32 0.0, %v468
        %v470 = vpop.f32.mrf.mxu0
        %v471 = vadd.f32 0.0, %v470
        %472 = vdwg.mxu0
        %v477 = vunpack.c.l.b16 %v357
        %v478 = vunpack.c.l.b16 %v358
        %v479 = vunpack.c.l.b16 %v359
        %v480 = vunpack.c.l.b16 %v360
        %v481 = vpack.c.b16 %v478, %v477
        %v482 = vpack.c.b16 %v480, %v479
        %v485 = vunpack.c.l.s4 1983009808
        %v486 = vunpack.c.0.s8 %v485
        %v487 = vlaneseq
        %v488 = vshrl.u32 %v487, 7
        %v489 = vsub.s32 %v486, %v488
        %v490 = vrot.slane %v356, %v489
        %v491 = vcombine.high %v490, %v490
        %v493 = vsel %vm403, %v481, 0
        %v496 = vsel %vm403, %v482, 0
        %v499 = vand.u32 %v490, %v413
        %v502 = vand.u32 %v491, %v413
        %504 = vmatprep.subr.bf16.mxu0 0
        %505 = vmatpush1.bf16.msra.mxu0 0
        %506 = vmatprep.subr.bf16.mxu0 0
        %507 = vmatpush1.bf16.msra.mxu0 0
        %508 = vmatprep.subr.bf16.mxu0 0
        %509 = vmatpush1.bf16.msra.mxu0 0
        %510 = vmatprep.subr.bf16.mxu0 0
        %511 = vmatpush1.bf16.msra.mxu0 0
        %512 = vmatprep.subr.bf16.mxu0 0
        %513 = vmatpush1.bf16.msra.mxu0 0
        %514 = vmatprep.subr.bf16.mxu0 0
        %515 = vmatpush1.bf16.msra.mxu0 0
        %516 = vmatprep.subr.bf16.mxu0 0
        %517 = vmatpush1.bf16.msra.mxu0 0
        %518 = vmatprep.subr.bf16.mxu0 %v502
        %519 = vmatpush1.bf16.msra.mxu0 %v499
        %520 = vmatprep.subr.bf16.mxu0 0
        %521 = vmatpush2.bf16.msra.mxu0 0
        %522 = vmatprep.subr.bf16.mxu0 0
        %523 = vmatpush2.bf16.msra.mxu0 0
        %524 = vmatprep.subr.bf16.mxu0 0
        %525 = vmatpush2.bf16.msra.mxu0 0
        %526 = vmatprep.subr.bf16.mxu0 0
        %527 = vmatpush2.bf16.msra.mxu0 0
        %528 = vmatprep.subr.bf16.mxu0 0
        %529 = vmatpush2.bf16.msra.mxu0 0
        %530 = vmatprep.subr.bf16.mxu0 0
        %531 = vmatpush2.bf16.msra.mxu0 0
        %532 = vmatprep.subr.bf16.mxu0 0
        %533 = vmatpush2.bf16.msra.mxu0 0
        %534 = vmatprep.subr.bf16.mxu0 0
        %535 = vmatpush2.bf16.msra.mxu0 0
        %536 = vmatprep.mubr.bf16.mxu0 0
        %537 = vmatmul.mubr.bf16.gmra.mxu0 %v493
        %v538 = vpop.f32.mrf.mxu0
        %v539 = vadd.f32 %v455, %v538
        %v540 = vpop.f32.mrf.mxu0
        %v541 = vadd.f32 %v457, %v540
        %v542 = vpop.f32.mrf.mxu0
        %v543 = vadd.f32 %v459, %v542
        %v544 = vpop.f32.mrf.mxu0
        %v545 = vadd.f32 %v461, %v544
        %546 = vmatprep.mubr.bf16.mxu0 0
        %547 = vmatmul.mubr.bf16.gmra.mxu0 %v496
        %v548 = vpop.f32.mrf.mxu0
        %v549 = vadd.f32 %v465, %v548
        %v550 = vpop.f32.mrf.mxu0
        %v551 = vadd.f32 %v467, %v550
        %v552 = vpop.f32.mrf.mxu0
        %v553 = vadd.f32 %v469, %v552
        %v554 = vpop.f32.mrf.mxu0
        %v555 = vadd.f32 %v471, %v554
        %556 = vdwg.mxu0
        %v557 = vld [vmem:[%s304] sm:$0x3f]
        %v558 = vld [vmem:[%s2] sm:$0x3]
        %v561 = vunpack.c.l.s4 1966171168
        %v562 = vunpack.c.0.s8 %v561
        %v563 = vlaneseq
        %v564 = vshrl.u32 %v563, 7
        %v565 = vsub.s32 %v562, %v564
        %v566 = vrot.slane %v558, %v565
        %v567 = vcombine.high %v566, %v566
        %v569 = vunpack.c.l.s4 1966171168
        %v570 = vunpack.c.0.s8 %v569
        %v571 = vlaneseq
        %v572 = vshrl.u32 %v571, 7
        %v573 = vsub.s32 %v570, %v572
        %v574 = vrot.slane %v566, %v573
        %v576 = vunpack.c.l.s4 1966171168
        %v577 = vunpack.c.0.s8 %v576
        %v578 = vlaneseq
        %v579 = vshrl.u32 %v578, 7
        %v580 = vsub.s32 %v577, %v579
        %v581 = vrot.slane %v567, %v580
        %v583 = vpack.i.b16 %v574, %v574
        %v585 = vlaneseq
        %v586 = vshrl.u32 %v585, 7
        %v587 = vsub.s32 0, %v586
        %v588 = vrot.slane %v583, %v587
        %v590 = vpack.i.b16 %v581, %v581
        %v592 = vlaneseq
        %v593 = vshrl.u32 %v592, 7
        %v594 = vsub.s32 0, %v593
        %v595 = vrot.slane %v590, %v594
        %v598 = vcombine.low %v588, %v595
        %v600 = vunpack.c.l.s4 1983009808
        %v601 = vunpack.c.0.s8 %v600
        %v602 = vlaneseq
        %v603 = vshrl.u32 %v602, 7
        %v604 = vsub.s32 %v601, %v603
        %v605 = vrot.slane %v598, %v604
        %606 = vrot.lane.b32.xlu0 %v605, 2
        %v607 = vpop.permute.xlu0 %606
        %v608 = vrot.slane %v607, 6
        %vm609 = vcmask 15360
        %v610 = vsel %vm609, %v608, %v607
        %v612 = vmul.bf16 %v557, %v610
        %s613 = scalar_lea.vmem %s3, 32
        %v614 = vld [vmem:[%s613] sm:$0xf]
        %v615 = vld [vmem:[%s613 + $0x4] sm:$0xf]
        %v616 = vld [vmem:[%s613 + $0x8] sm:$0xf]
        %v617 = vld [vmem:[%s613 + $0xc] sm:$0xf]
        %v622 = vunpack.c.l.b16 %v614
        %v623 = vunpack.c.l.b16 %v615
        %v624 = vunpack.c.l.b16 %v616
        %v625 = vunpack.c.l.b16 %v617
        %v626 = vpack.c.b16 %v623, %v622
        %v627 = vpack.c.b16 %v625, %v624
        %v629 = vcombine.high %v612, %v612
        %v631 = vunpack.c.l.s4 1983009808
        %v632 = vunpack.c.0.s8 %v631
        %v633 = vlaneseq
        %v634 = vshrl.u32 %v633, 7
        %v635 = vsub.s32 %v632, %v634
        %v636 = vrot.slane %v612, %v635
        %v638 = vunpack.c.l.s4 1983009808
        %v639 = vunpack.c.0.s8 %v638
        %v640 = vlaneseq
        %v641 = vshrl.u32 %v640, 7
        %v642 = vsub.s32 %v639, %v641
        %v643 = vrot.slane %v629, %v642
        %v644 = vcombine.high %v636, %v636
        %645 = vrot.lane.b32.xlu0 %v636, 126
        %v646 = vpop.permute.xlu0 %645
        %647 = vrot.lane.b32.xlu0 %v644, 126
        %v648 = vpop.permute.xlu0 %647
        %649 = vrot.lane.b32.xlu0 %v643, 126
        %v650 = vpop.permute.xlu0 %649
        %vm651 = vcmask 1031168
        %v652 = vsel %vm651, %v646, %v648
        %v653 = vsel %vm651, %v648, %v650
        %v655 = vsel %vm403, %v626, 0
        %v658 = vsel %vm403, %v627, 0
        %v661 = vand.u32 %v652, %v413
        %v664 = vand.u32 %v653, %v413
        %666 = vmatprep.subr.bf16.mxu0 0
        %667 = vmatpush1.bf16.msra.mxu0 0
        %668 = vmatprep.subr.bf16.mxu0 0
        %669 = vmatpush1.bf16.msra.mxu0 0
        %670 = vmatprep.subr.bf16.mxu0 0
        %671 = vmatpush1.bf16.msra.mxu0 0
        %672 = vmatprep.subr.bf16.mxu0 0
        %673 = vmatpush1.bf16.msra.mxu0 0
        %674 = vmatprep.subr.bf16.mxu0 0
        %675 = vmatpush1.bf16.msra.mxu0 0
        %676 = vmatprep.subr.bf16.mxu0 0
        %677 = vmatpush1.bf16.msra.mxu0 0
        %678 = vmatprep.subr.bf16.mxu0 0
        %679 = vmatpush1.bf16.msra.mxu0 0
        %680 = vmatprep.subr.bf16.mxu0 %v664
        %681 = vmatpush1.bf16.msra.mxu0 %v661
        %682 = vmatprep.subr.bf16.mxu0 0
        %683 = vmatpush2.bf16.msra.mxu0 0
        %684 = vmatprep.subr.bf16.mxu0 0
        %685 = vmatpush2.bf16.msra.mxu0 0
        %686 = vmatprep.subr.bf16.mxu0 0
        %687 = vmatpush2.bf16.msra.mxu0 0
        %688 = vmatprep.subr.bf16.mxu0 0
        %689 = vmatpush2.bf16.msra.mxu0 0
        %690 = vmatprep.subr.bf16.mxu0 0
        %691 = vmatpush2.bf16.msra.mxu0 0
        %692 = vmatprep.subr.bf16.mxu0 0
        %693 = vmatpush2.bf16.msra.mxu0 0
        %694 = vmatprep.subr.bf16.mxu0 0
        %695 = vmatpush2.bf16.msra.mxu0 0
        %696 = vmatprep.subr.bf16.mxu0 0
        %697 = vmatpush2.bf16.msra.mxu0 0
        %698 = vmatprep.mubr.bf16.mxu0 0
        %699 = vmatmul.mubr.bf16.gmra.mxu0 %v655
        %v700 = vpop.f32.mrf.mxu0
        %v701 = vadd.f32 0.0, %v700
        %v702 = vpop.f32.mrf.mxu0
        %v703 = vadd.f32 0.0, %v702
        %v704 = vpop.f32.mrf.mxu0
        %v705 = vadd.f32 0.0, %v704
        %v706 = vpop.f32.mrf.mxu0
        %v707 = vadd.f32 0.0, %v706
        %708 = vmatprep.mubr.bf16.mxu0 0
        %709 = vmatmul.mubr.bf16.gmra.mxu0 %v658
        %v710 = vpop.f32.mrf.mxu0
        %v711 = vadd.f32 0.0, %v710
        %v712 = vpop.f32.mrf.mxu0
        %v713 = vadd.f32 0.0, %v712
        %v714 = vpop.f32.mrf.mxu0
        %v715 = vadd.f32 0.0, %v714
        %v716 = vpop.f32.mrf.mxu0
        %v717 = vadd.f32 0.0, %v716
        %718 = vdwg.mxu0
        %v719 = vadd.f32 %v539, %v701
        %v720 = vadd.f32 %v541, %v703
        %v721 = vadd.f32 %v543, %v705
        %v722 = vadd.f32 %v545, %v707
        %v723 = vadd.f32 %v549, %v711
        %v724 = vadd.f32 %v551, %v713
        %v725 = vadd.f32 %v553, %v715
        %v726 = vadd.f32 %v555, %v717
        %v727 = vld [vmem:[%s304] sm:$0x3f]
        %728 = vrot.lane.b32.xlu0 %v354, 16
        %v729 = vpop.permute.xlu0 %728
        %v730 = vrot.slane %v729, 6
        %vm731 = vcmask 130048
        %v732 = vsel %vm731, %v730, %v729
        %v734 = vmul.bf16 %v727, %v732
        %s735 = scalar_lea.vmem %s3, 48
        %v736 = vld [vmem:[%s735] sm:$0xf]
        %v737 = vld [vmem:[%s735 + $0x4] sm:$0xf]
        %v738 = vld [vmem:[%s735 + $0x8] sm:$0xf]
        %v739 = vld [vmem:[%s735 + $0xc] sm:$0xf]
        %v744 = vunpack.c.l.b16 %v736
        %v745 = vunpack.c.l.b16 %v737
        %v746 = vunpack.c.l.b16 %v738
        %v747 = vunpack.c.l.b16 %v739
        %v748 = vpack.c.b16 %v745, %v744
        %v749 = vpack.c.b16 %v747, %v746
        %v751 = vcombine.high %v734, %v734
        %v753 = vunpack.c.l.s4 1983009808
        %v754 = vunpack.c.0.s8 %v753
        %v755 = vlaneseq
        %v756 = vshrl.u32 %v755, 7
        %v757 = vsub.s32 %v754, %v756
        %v758 = vrot.slane %v734, %v757
        %v760 = vunpack.c.l.s4 1983009808
        %v761 = vunpack.c.0.s8 %v760
        %v762 = vlaneseq
        %v763 = vshrl.u32 %v762, 7
        %v764 = vsub.s32 %v761, %v763
        %v765 = vrot.slane %v751, %v764
        %v766 = vcombine.high %v758, %v758
        %767 = vrot.lane.b32.xlu0 %v758, 112
        %v768 = vpop.permute.xlu0 %767
        %769 = vrot.lane.b32.xlu0 %v766, 112
        %v770 = vpop.permute.xlu0 %769
        %771 = vrot.lane.b32.xlu0 %v765, 112
        %v772 = vpop.permute.xlu0 %771
        %vm773 = vcmask 916480
        %v774 = vsel %vm773, %v768, %v770
        %v775 = vsel %vm773, %v770, %v772
        %v777 = vsel %vm403, %v748, 0
        %v780 = vsel %vm403, %v749, 0
        %v783 = vand.u32 %v774, %v413
        %v786 = vand.u32 %v775, %v413
        %788 = vmatprep.subr.bf16.mxu0 0
        %789 = vmatpush1.bf16.msra.mxu0 0
        %790 = vmatprep.subr.bf16.mxu0 0
        %791 = vmatpush1.bf16.msra.mxu0 0
        %792 = vmatprep.subr.bf16.mxu0 0
        %793 = vmatpush1.bf16.msra.mxu0 0
        %794 = vmatprep.subr.bf16.mxu0 0
        %795 = vmatpush1.bf16.msra.mxu0 0
        %796 = vmatprep.subr.bf16.mxu0 0
        %797 = vmatpush1.bf16.msra.mxu0 0
        %798 = vmatprep.subr.bf16.mxu0 0
        %799 = vmatpush1.bf16.msra.mxu0 0
        %800 = vmatprep.subr.bf16.mxu0 0
        %801 = vmatpush1.bf16.msra.mxu0 0
        %802 = vmatprep.subr.bf16.mxu0 %v786
        %803 = vmatpush1.bf16.msra.mxu0 %v783
        %804 = vmatprep.subr.bf16.mxu0 0
        %805 = vmatpush2.bf16.msra.mxu0 0
        %806 = vmatprep.subr.bf16.mxu0 0
        %807 = vmatpush2.bf16.msra.mxu0 0
        %808 = vmatprep.subr.bf16.mxu0 0
        %809 = vmatpush2.bf16.msra.mxu0 0
        %810 = vmatprep.subr.bf16.mxu0 0
        %811 = vmatpush2.bf16.msra.mxu0 0
        %812 = vmatprep.subr.bf16.mxu0 0
        %813 = vmatpush2.bf16.msra.mxu0 0
        %814 = vmatprep.subr.bf16.mxu0 0
        %815 = vmatpush2.bf16.msra.mxu0 0
        %816 = vmatprep.subr.bf16.mxu0 0
        %817 = vmatpush2.bf16.msra.mxu0 0
        %818 = vmatprep.subr.bf16.mxu0 0
        %819 = vmatpush2.bf16.msra.mxu0 0
        %820 = vmatprep.mubr.bf16.mxu0 0
        %821 = vmatmul.mubr.bf16.gmra.mxu0 %v777
        %v822 = vpop.f32.mrf.mxu0
        %v823 = vadd.f32 0.0, %v822
        %v824 = vpop.f32.mrf.mxu0
        %v825 = vadd.f32 0.0, %v824
        %v826 = vpop.f32.mrf.mxu0
        %v827 = vadd.f32 0.0, %v826
        %v828 = vpop.f32.mrf.mxu0
        %v829 = vadd.f32 0.0, %v828
        %830 = vmatprep.mubr.bf16.mxu0 0
        %831 = vmatmul.mubr.bf16.gmra.mxu0 %v780
        %v832 = vpop.f32.mrf.mxu0
        %v833 = vadd.f32 0.0, %v832
        %v834 = vpop.f32.mrf.mxu0
        %v835 = vadd.f32 0.0, %v834
        %v836 = vpop.f32.mrf.mxu0
        %v837 = vadd.f32 0.0, %v836
        %v838 = vpop.f32.mrf.mxu0
        %v839 = vadd.f32 0.0, %v838
        %840 = vdwg.mxu0
        %v841 = vadd.f32 %v719, %v823
        %v842 = vadd.f32 %v720, %v825
        %v843 = vadd.f32 %v721, %v827
        %v844 = vadd.f32 %v722, %v829
        %v845 = vadd.f32 %v723, %v833
        %v846 = vadd.f32 %v724, %v835
        %v847 = vadd.f32 %v725, %v837
        %v848 = vadd.f32 %v726, %v839
        %v849 = vld [vmem:[%s304] sm:$0x3f]
        %s850 = scalar_lea.vmem %s3, 64
        %v851 = vld [vmem:[%s850] sm:$0xf]
        %v852 = vld [vmem:[%s850 + $0x4] sm:$0xf]
        %v853 = vld [vmem:[%s850 + $0x8] sm:$0xf]
        %v854 = vld [vmem:[%s850 + $0xc] sm:$0xf]
        %v859 = vunpack.c.l.b16 %v851
        %v860 = vunpack.c.l.b16 %v852
        %v861 = vunpack.c.l.b16 %v853
        %v862 = vunpack.c.l.b16 %v854
        %v863 = vpack.c.b16 %v860, %v859
        %v864 = vpack.c.b16 %v862, %v861
        %v866 = vcombine.high %v849, %v849
        %v868 = vunpack.c.l.s4 1983009808
        %v869 = vunpack.c.0.s8 %v868
        %v870 = vlaneseq
        %v871 = vshrl.u32 %v870, 7
        %v872 = vsub.s32 %v869, %v871
        %v873 = vrot.slane %v849, %v872
        %v875 = vunpack.c.l.s4 1983009808
        %v876 = vunpack.c.0.s8 %v875
        %v877 = vlaneseq
        %v878 = vshrl.u32 %v877, 7
        %v879 = vsub.s32 %v876, %v878
        %v880 = vrot.slane %v866, %v879
        %v881 = vcombine.high %v873, %v873
        %882 = vrot.lane.b32.xlu0 %v873, 111
        %v883 = vpop.permute.xlu0 %882
        %884 = vrot.lane.b32.xlu0 %v881, 111
        %v885 = vpop.permute.xlu0 %884
        %886 = vrot.lane.b32.xlu0 %v880, 111
        %v887 = vpop.permute.xlu0 %886
        %vm888 = vcmask 908288
        %v889 = vsel %vm888, %v883, %v885
        %v890 = vsel %vm888, %v885, %v887
        %v892 = vsel %vm403, %v863, 0
        %v895 = vsel %vm403, %v864, 0
        %v898 = vand.u32 %v889, %v413
        %v901 = vand.u32 %v890, %v413
        %903 = vmatprep.subr.bf16.mxu0 0
        %904 = vmatpush1.bf16.msra.mxu0 0
        %905 = vmatprep.subr.bf16.mxu0 0
        %906 = vmatpush1.bf16.msra.mxu0 0
        %907 = vmatprep.subr.bf16.mxu0 0
        %908 = vmatpush1.bf16.msra.mxu0 0
        %909 = vmatprep.subr.bf16.mxu0 0
        %910 = vmatpush1.bf16.msra.mxu0 0
        %911 = vmatprep.subr.bf16.mxu0 0
        %912 = vmatpush1.bf16.msra.mxu0 0
        %913 = vmatprep.subr.bf16.mxu0 0
        %914 = vmatpush1.bf16.msra.mxu0 0
        %915 = vmatprep.subr.bf16.mxu0 0
        %916 = vmatpush1.bf16.msra.mxu0 0
        %917 = vmatprep.subr.bf16.mxu0 %v901
        %918 = vmatpush1.bf16.msra.mxu0 %v898
        %919 = vmatprep.subr.bf16.mxu0 0
        %920 = vmatpush2.bf16.msra.mxu0 0
        %921 = vmatprep.subr.bf16.mxu0 0
        %922 = vmatpush2.bf16.msra.mxu0 0
        %923 = vmatprep.subr.bf16.mxu0 0
        %924 = vmatpush2.bf16.msra.mxu0 0
        %925 = vmatprep.subr.bf16.mxu0 0
        %926 = vmatpush2.bf16.msra.mxu0 0
        %927 = vmatprep.subr.bf16.mxu0 0
        %928 = vmatpush2.bf16.msra.mxu0 0
        %929 = vmatprep.subr.bf16.mxu0 0
        %930 = vmatpush2.bf16.msra.mxu0 0
        %931 = vmatprep.subr.bf16.mxu0 0
        %932 = vmatpush2.bf16.msra.mxu0 0
        %933 = vmatprep.subr.bf16.mxu0 0
        %934 = vmatpush2.bf16.msra.mxu0 0
        %935 = vmatprep.mubr.bf16.mxu0 0
        %936 = vmatmul.mubr.bf16.gmra.mxu0 %v892
        %v937 = vpop.f32.mrf.mxu0
        %v938 = vadd.f32 0.0, %v937
        %v939 = vpop.f32.mrf.mxu0
        %v940 = vadd.f32 0.0, %v939
        %v941 = vpop.f32.mrf.mxu0
        %v942 = vadd.f32 0.0, %v941
        %v943 = vpop.f32.mrf.mxu0
        %v944 = vadd.f32 0.0, %v943
        %945 = vmatprep.mubr.bf16.mxu0 0
        %946 = vmatmul.mubr.bf16.gmra.mxu0 %v895
        %v947 = vpop.f32.mrf.mxu0
        %v948 = vadd.f32 0.0, %v947
        %v949 = vpop.f32.mrf.mxu0
        %v950 = vadd.f32 0.0, %v949
        %v951 = vpop.f32.mrf.mxu0
        %v952 = vadd.f32 0.0, %v951
        %v953 = vpop.f32.mrf.mxu0
        %v954 = vadd.f32 0.0, %v953
        %955 = vdwg.mxu0
        %v956 = vadd.f32 %v841, %v938
        %v957 = vadd.f32 %v842, %v940
        %v958 = vadd.f32 %v843, %v942
        %v959 = vadd.f32 %v844, %v944
        %v960 = vadd.f32 %v845, %v948
        %v961 = vadd.f32 %v846, %v950
        %v962 = vadd.f32 %v847, %v952
        %v963 = vadd.f32 %v848, %v954
        %v964 = vld [vmem:[%s304] sm:$0x3f]
        %965 = vrot.lane.b32.xlu0 %v605, 18
        %v966 = vpop.permute.xlu0 %965
        %v967 = vrot.slane %v966, 6
        %vm968 = vcmask 146432
        %v969 = vsel %vm968, %v967, %v966
        %v971 = vmul.bf16 %v964, %v969
        %s972 = scalar_lea.vmem %s3, 80
        %v973 = vld [vmem:[%s972] sm:$0xf]
        %v974 = vld [vmem:[%s972 + $0x4] sm:$0xf]
        %v975 = vld [vmem:[%s972 + $0x8] sm:$0xf]
        %v976 = vld [vmem:[%s972 + $0xc] sm:$0xf]
        %v981 = vunpack.c.l.b16 %v973
        %v982 = vunpack.c.l.b16 %v974
        %v983 = vunpack.c.l.b16 %v975
        %v984 = vunpack.c.l.b16 %v976
        %v985 = vpack.c.b16 %v982, %v981
        %v986 = vpack.c.b16 %v984, %v983
        %v988 = vcombine.high %v971, %v971
        %v990 = vunpack.c.l.s4 1983009808
        %v991 = vunpack.c.0.s8 %v990
        %v992 = vlaneseq
        %v993 = vshrl.u32 %v992, 7
        %v994 = vsub.s32 %v991, %v993
        %v995 = vrot.slane %v971, %v994
        %v997 = vunpack.c.l.s4 1983009808
        %v998 = vunpack.c.0.s8 %v997
        %v999 = vlaneseq
        %v1000 = vshrl.u32 %v999, 7
        %v1001 = vsub.s32 %v998, %v1000
        %v1002 = vrot.slane %v988, %v1001
        %v1003 = vcombine.high %v995, %v995
        %1004 = vrot.lane.b32.xlu0 %v995, 110
        %v1005 = vpop.permute.xlu0 %1004
        %1006 = vrot.lane.b32.xlu0 %v1003, 110
        %v1007 = vpop.permute.xlu0 %1006
        %1008 = vrot.lane.b32.xlu0 %v1002, 110
        %v1009 = vpop.permute.xlu0 %1008
        %vm1010 = vcmask 900096
        %v1011 = vsel %vm1010, %v1005, %v1007
        %v1012 = vsel %vm1010, %v1007, %v1009
        %v1014 = vsel %vm403, %v985, 0
        %v1017 = vsel %vm403, %v986, 0
        %v1020 = vand.u32 %v1011, %v413
        %v1023 = vand.u32 %v1012, %v413
        %1025 = vmatprep.subr.bf16.mxu0 0
        %1026 = vmatpush1.bf16.msra.mxu0 0
        %1027 = vmatprep.subr.bf16.mxu0 0
        %1028 = vmatpush1.bf16.msra.mxu0 0
        %1029 = vmatprep.subr.bf16.mxu0 0
        %1030 = vmatpush1.bf16.msra.mxu0 0
        %1031 = vmatprep.subr.bf16.mxu0 0
        %1032 = vmatpush1.bf16.msra.mxu0 0
        %1033 = vmatprep.subr.bf16.mxu0 0
        %1034 = vmatpush1.bf16.msra.mxu0 0
        %1035 = vmatprep.subr.bf16.mxu0 0
        %1036 = vmatpush1.bf16.msra.mxu0 0
        %1037 = vmatprep.subr.bf16.mxu0 0
        %1038 = vmatpush1.bf16.msra.mxu0 0
        %1039 = vmatprep.subr.bf16.mxu0 %v1023
        %1040 = vmatpush1.bf16.msra.mxu0 %v1020
        %1041 = vmatprep.subr.bf16.mxu0 0
        %1042 = vmatpush2.bf16.msra.mxu0 0
        %1043 = vmatprep.subr.bf16.mxu0 0
        %1044 = vmatpush2.bf16.msra.mxu0 0
        %1045 = vmatprep.subr.bf16.mxu0 0
        %1046 = vmatpush2.bf16.msra.mxu0 0
        %1047 = vmatprep.subr.bf16.mxu0 0
        %1048 = vmatpush2.bf16.msra.mxu0 0
        %1049 = vmatprep.subr.bf16.mxu0 0
        %1050 = vmatpush2.bf16.msra.mxu0 0
        %1051 = vmatprep.subr.bf16.mxu0 0
        %1052 = vmatpush2.bf16.msra.mxu0 0
        %1053 = vmatprep.subr.bf16.mxu0 0
        %1054 = vmatpush2.bf16.msra.mxu0 0
        %1055 = vmatprep.subr.bf16.mxu0 0
        %1056 = vmatpush2.bf16.msra.mxu0 0
        %1057 = vmatprep.mubr.bf16.mxu0 0
        %1058 = vmatmul.mubr.bf16.gmra.mxu0 %v1014
        %v1059 = vpop.f32.mrf.mxu0
        %v1060 = vadd.f32 0.0, %v1059
        %v1061 = vpop.f32.mrf.mxu0
        %v1062 = vadd.f32 0.0, %v1061
        %v1063 = vpop.f32.mrf.mxu0
        %v1064 = vadd.f32 0.0, %v1063
        %v1065 = vpop.f32.mrf.mxu0
        %v1066 = vadd.f32 0.0, %v1065
        %1067 = vmatprep.mubr.bf16.mxu0 0
        %1068 = vmatmul.mubr.bf16.gmra.mxu0 %v1017
        %v1069 = vpop.f32.mrf.mxu0
        %v1070 = vadd.f32 0.0, %v1069
        %v1071 = vpop.f32.mrf.mxu0
        %v1072 = vadd.f32 0.0, %v1071
        %v1073 = vpop.f32.mrf.mxu0
        %v1074 = vadd.f32 0.0, %v1073
        %v1075 = vpop.f32.mrf.mxu0
        %v1076 = vadd.f32 0.0, %v1075
        %1077 = vdwg.mxu0
        %v1078 = vadd.f32 %v956, %v1060
        %v1079 = vadd.f32 %v957, %v1062
        %v1080 = vadd.f32 %v958, %v1064
        %v1081 = vadd.f32 %v959, %v1066
        %v1082 = vadd.f32 %v960, %v1070
        %v1083 = vadd.f32 %v961, %v1072
        %v1084 = vadd.f32 %v962, %v1074
        %v1085 = vadd.f32 %v963, %v1076
        %v1086 = vld [vmem:[%s304] sm:$0x3f]
        %1087 = vrot.lane.b32.xlu0 %v354, 32
        %v1088 = vpop.permute.xlu0 %1087
        %v1089 = vrot.slane %v1088, 6
        %vm1090 = vcmask 261120
        %v1091 = vsel %vm1090, %v1089, %v1088
        %v1093 = vmul.bf16 %v1086, %v1091
        %s1094 = scalar_lea.vmem %s3, 96
        %v1095 = vld [vmem:[%s1094] sm:$0xf]
        %v1096 = vld [vmem:[%s1094 + $0x4] sm:$0xf]
        %v1097 = vld [vmem:[%s1094 + $0x8] sm:$0xf]
        %v1098 = vld [vmem:[%s1094 + $0xc] sm:$0xf]
        %v1103 = vunpack.c.l.b16 %v1095
        %v1104 = vunpack.c.l.b16 %v1096
        %v1105 = vunpack.c.l.b16 %v1097
        %v1106 = vunpack.c.l.b16 %v1098
        %v1107 = vpack.c.b16 %v1104, %v1103
        %v1108 = vpack.c.b16 %v1106, %v1105
        %v1110 = vcombine.high %v1093, %v1093
        %v1112 = vunpack.c.l.s4 1983009808
        %v1113 = vunpack.c.0.s8 %v1112
        %v1114 = vlaneseq
        %v1115 = vshrl.u32 %v1114, 7
        %v1116 = vsub.s32 %v1113, %v1115
        %v1117 = vrot.slane %v1093, %v1116
        %v1119 = vunpack.c.l.s4 1983009808
        %v1120 = vunpack.c.0.s8 %v1119
        %v1121 = vlaneseq
        %v1122 = vshrl.u32 %v1121, 7
        %v1123 = vsub.s32 %v1120, %v1122
        %v1124 = vrot.slane %v1110, %v1123
        %v1125 = vcombine.high %v1117, %v1117
        %1126 = vrot.lane.b32.xlu0 %v1117, 96
        %v1127 = vpop.permute.xlu0 %1126
        %1128 = vrot.lane.b32.xlu0 %v1125, 96
        %v1129 = vpop.permute.xlu0 %1128
        %1130 = vrot.lane.b32.xlu0 %v1124, 96
        %v1131 = vpop.permute.xlu0 %1130
        %vm1132 = vcmask 785408
        %v1133 = vsel %vm1132, %v1127, %v1129
        %v1134 = vsel %vm1132, %v1129, %v1131
        %v1136 = vsel %vm403, %v1107, 0
        %v1139 = vsel %vm403, %v1108, 0
        %v1142 = vand.u32 %v1133, %v413
        %v1145 = vand.u32 %v1134, %v413
        %1147 = vmatprep.subr.bf16.mxu0 0
        %1148 = vmatpush1.bf16.msra.mxu0 0
        %1149 = vmatprep.subr.bf16.mxu0 0
        %1150 = vmatpush1.bf16.msra.mxu0 0
        %1151 = vmatprep.subr.bf16.mxu0 0
        %1152 = vmatpush1.bf16.msra.mxu0 0
        %1153 = vmatprep.subr.bf16.mxu0 0
        %1154 = vmatpush1.bf16.msra.mxu0 0
        %1155 = vmatprep.subr.bf16.mxu0 0
        %1156 = vmatpush1.bf16.msra.mxu0 0
        %1157 = vmatprep.subr.bf16.mxu0 0
        %1158 = vmatpush1.bf16.msra.mxu0 0
        %1159 = vmatprep.subr.bf16.mxu0 0
        %1160 = vmatpush1.bf16.msra.mxu0 0
        %1161 = vmatprep.subr.bf16.mxu0 %v1145
        %1162 = vmatpush1.bf16.msra.mxu0 %v1142
        %1163 = vmatprep.subr.bf16.mxu0 0
        %1164 = vmatpush2.bf16.msra.mxu0 0
        %1165 = vmatprep.subr.bf16.mxu0 0
        %1166 = vmatpush2.bf16.msra.mxu0 0
        %1167 = vmatprep.subr.bf16.mxu0 0
        %1168 = vmatpush2.bf16.msra.mxu0 0
        %1169 = vmatprep.subr.bf16.mxu0 0
        %1170 = vmatpush2.bf16.msra.mxu0 0
        %1171 = vmatprep.subr.bf16.mxu0 0
        %1172 = vmatpush2.bf16.msra.mxu0 0
        %1173 = vmatprep.subr.bf16.mxu0 0
        %1174 = vmatpush2.bf16.msra.mxu0 0
        %1175 = vmatprep.subr.bf16.mxu0 0
        %1176 = vmatpush2.bf16.msra.mxu0 0
        %1177 = vmatprep.subr.bf16.mxu0 0
        %1178 = vmatpush2.bf16.msra.mxu0 0
        %1179 = vmatprep.mubr.bf16.mxu0 0
        %1180 = vmatmul.mubr.bf16.gmra.mxu0 %v1136
        %v1181 = vpop.f32.mrf.mxu0
        %v1182 = vadd.f32 0.0, %v1181
        %v1183 = vpop.f32.mrf.mxu0
        %v1184 = vadd.f32 0.0, %v1183
        %v1185 = vpop.f32.mrf.mxu0
        %v1186 = vadd.f32 0.0, %v1185
        %v1187 = vpop.f32.mrf.mxu0
        %v1188 = vadd.f32 0.0, %v1187
        %1189 = vmatprep.mubr.bf16.mxu0 0
        %1190 = vmatmul.mubr.bf16.gmra.mxu0 %v1139
        %v1191 = vpop.f32.mrf.mxu0
        %v1192 = vadd.f32 0.0, %v1191
        %v1193 = vpop.f32.mrf.mxu0
        %v1194 = vadd.f32 0.0, %v1193
        %v1195 = vpop.f32.mrf.mxu0
        %v1196 = vadd.f32 0.0, %v1195
        %v1197 = vpop.f32.mrf.mxu0
        %v1198 = vadd.f32 0.0, %v1197
        %1199 = vdwg.mxu0
        %v1200 = vadd.f32 %v1078, %v1182
        %v1201 = vadd.f32 %v1079, %v1184
        %v1202 = vadd.f32 %v1080, %v1186
        %v1203 = vadd.f32 %v1081, %v1188
        %v1204 = vadd.f32 %v1082, %v1192
        %v1205 = vadd.f32 %v1083, %v1194
        %v1206 = vadd.f32 %v1084, %v1196
        %v1207 = vadd.f32 %v1085, %v1198
        %v1208 = vld [vmem:[%s304] sm:$0x3f]
        %s1209 = scalar_lea.vmem %s3, 112
        %v1210 = vld [vmem:[%s1209] sm:$0xf]
        %v1211 = vld [vmem:[%s1209 + $0x4] sm:$0xf]
        %v1212 = vld [vmem:[%s1209 + $0x8] sm:$0xf]
        %v1213 = vld [vmem:[%s1209 + $0xc] sm:$0xf]
        %v1218 = vunpack.c.l.b16 %v1210
        %v1219 = vunpack.c.l.b16 %v1211
        %v1220 = vunpack.c.l.b16 %v1212
        %v1221 = vunpack.c.l.b16 %v1213
        %v1222 = vpack.c.b16 %v1219, %v1218
        %v1223 = vpack.c.b16 %v1221, %v1220
        %v1225 = vcombine.high %v1208, %v1208
        %v1227 = vunpack.c.l.s4 1983009808
        %v1228 = vunpack.c.0.s8 %v1227
        %v1229 = vlaneseq
        %v1230 = vshrl.u32 %v1229, 7
        %v1231 = vsub.s32 %v1228, %v1230
        %v1232 = vrot.slane %v1208, %v1231
        %v1234 = vunpack.c.l.s4 1983009808
        %v1235 = vunpack.c.0.s8 %v1234
        %v1236 = vlaneseq
        %v1237 = vshrl.u32 %v1236, 7
        %v1238 = vsub.s32 %v1235, %v1237
        %v1239 = vrot.slane %v1225, %v1238
        %v1240 = vcombine.high %v1232, %v1232
        %1241 = vrot.lane.b32.xlu0 %v1232, 95
        %v1242 = vpop.permute.xlu0 %1241
        %1243 = vrot.lane.b32.xlu0 %v1240, 95
        %v1244 = vpop.permute.xlu0 %1243
        %1245 = vrot.lane.b32.xlu0 %v1239, 95
        %v1246 = vpop.permute.xlu0 %1245
        %vm1247 = vcmask 777216
        %v1248 = vsel %vm1247, %v1242, %v1244
        %v1249 = vsel %vm1247, %v1244, %v1246
        %v1251 = vsel %vm403, %v1222, 0
        %v1254 = vsel %vm403, %v1223, 0
        %v1257 = vand.u32 %v1248, %v413
        %v1260 = vand.u32 %v1249, %v413
        %1262 = vmatprep.subr.bf16.mxu0 0
        %1263 = vmatpush1.bf16.msra.mxu0 0
        %1264 = vmatprep.subr.bf16.mxu0 0
        %1265 = vmatpush1.bf16.msra.mxu0 0
        %1266 = vmatprep.subr.bf16.mxu0 0
        %1267 = vmatpush1.bf16.msra.mxu0 0
        %1268 = vmatprep.subr.bf16.mxu0 0
        %1269 = vmatpush1.bf16.msra.mxu0 0
        %1270 = vmatprep.subr.bf16.mxu0 0
        %1271 = vmatpush1.bf16.msra.mxu0 0
        %1272 = vmatprep.subr.bf16.mxu0 0
        %1273 = vmatpush1.bf16.msra.mxu0 0
        %1274 = vmatprep.subr.bf16.mxu0 0
        %1275 = vmatpush1.bf16.msra.mxu0 0
        %1276 = vmatprep.subr.bf16.mxu0 %v1260
        %1277 = vmatpush1.bf16.msra.mxu0 %v1257
        %1278 = vmatprep.subr.bf16.mxu0 0
        %1279 = vmatpush2.bf16.msra.mxu0 0
        %1280 = vmatprep.subr.bf16.mxu0 0
        %1281 = vmatpush2.bf16.msra.mxu0 0
        %1282 = vmatprep.subr.bf16.mxu0 0
        %1283 = vmatpush2.bf16.msra.mxu0 0
        %1284 = vmatprep.subr.bf16.mxu0 0
        %1285 = vmatpush2.bf16.msra.mxu0 0
        %1286 = vmatprep.subr.bf16.mxu0 0
        %1287 = vmatpush2.bf16.msra.mxu0 0
        %1288 = vmatprep.subr.bf16.mxu0 0
        %1289 = vmatpush2.bf16.msra.mxu0 0
        %1290 = vmatprep.subr.bf16.mxu0 0
        %1291 = vmatpush2.bf16.msra.mxu0 0
        %1292 = vmatprep.subr.bf16.mxu0 0
        %1293 = vmatpush2.bf16.msra.mxu0 0
        %1294 = vmatprep.mubr.bf16.mxu0 0
        %1295 = vmatmul.mubr.bf16.gmra.mxu0 %v1251
        %v1296 = vpop.f32.mrf.mxu0
        %v1297 = vadd.f32 0.0, %v1296
        %v1298 = vpop.f32.mrf.mxu0
        %v1299 = vadd.f32 0.0, %v1298
        %v1300 = vpop.f32.mrf.mxu0
        %v1301 = vadd.f32 0.0, %v1300
        %v1302 = vpop.f32.mrf.mxu0
        %v1303 = vadd.f32 0.0, %v1302
        %1304 = vmatprep.mubr.bf16.mxu0 0
        %1305 = vmatmul.mubr.bf16.gmra.mxu0 %v1254
        %v1306 = vpop.f32.mrf.mxu0
        %v1307 = vadd.f32 0.0, %v1306
        %v1308 = vpop.f32.mrf.mxu0
        %v1309 = vadd.f32 0.0, %v1308
        %v1310 = vpop.f32.mrf.mxu0
        %v1311 = vadd.f32 0.0, %v1310
        %v1312 = vpop.f32.mrf.mxu0
        %v1313 = vadd.f32 0.0, %v1312
        %1314 = vdwg.mxu0
        %v1315 = vadd.f32 %v1200, %v1297
        %v1316 = vadd.f32 %v1201, %v1299
        %v1317 = vadd.f32 %v1202, %v1301
        %v1318 = vadd.f32 %v1203, %v1303
        %v1319 = vadd.f32 %v1204, %v1307
        %v1320 = vadd.f32 %v1205, %v1309
        %v1321 = vadd.f32 %v1206, %v1311
        %v1322 = vadd.f32 %v1207, %v1313
        %v1323 = vld [vmem:[%s304] sm:$0x3f]
        %1324 = vrot.lane.b32.xlu0 %v605, 34
        %v1325 = vpop.permute.xlu0 %1324
        %v1326 = vrot.slane %v1325, 6
        %vm1327 = vcmask 277504
        %v1328 = vsel %vm1327, %v1326, %v1325
        %v1330 = vmul.bf16 %v1323, %v1328
        %s1331 = scalar_lea.vmem %s3, 128
        %v1332 = vld [vmem:[%s1331] sm:$0xf]
        %v1333 = vld [vmem:[%s1331 + $0x4] sm:$0xf]
        %v1334 = vld [vmem:[%s1331 + $0x8] sm:$0xf]
        %v1335 = vld [vmem:[%s1331 + $0xc] sm:$0xf]
        %v1340 = vunpack.c.l.b16 %v1332
        %v1341 = vunpack.c.l.b16 %v1333
        %v1342 = vunpack.c.l.b16 %v1334
        %v1343 = vunpack.c.l.b16 %v1335
        %v1344 = vpack.c.b16 %v1341, %v1340
        %v1345 = vpack.c.b16 %v1343, %v1342
        %v1347 = vcombine.high %v1330, %v1330
        %v1349 = vunpack.c.l.s4 1983009808
        %v1350 = vunpack.c.0.s8 %v1349
        %v1351 = vlaneseq
        %v1352 = vshrl.u32 %v1351, 7
        %v1353 = vsub.s32 %v1350, %v1352
        %v1354 = vrot.slane %v1330, %v1353
        %v1356 = vunpack.c.l.s4 1983009808
        %v1357 = vunpack.c.0.s8 %v1356
        %v1358 = vlaneseq
        %v1359 = vshrl.u32 %v1358, 7
        %v1360 = vsub.s32 %v1357, %v1359
        %v1361 = vrot.slane %v1347, %v1360
        %v1362 = vcombine.high %v1354, %v1354
        %1363 = vrot.lane.b32.xlu0 %v1354, 94
        %v1364 = vpop.permute.xlu0 %1363
        %1365 = vrot.lane.b32.xlu0 %v1362, 94
        %v1366 = vpop.permute.xlu0 %1365
        %1367 = vrot.lane.b32.xlu0 %v1361, 94
        %v1368 = vpop.permute.xlu0 %1367
        %vm1369 = vcmask 769024
        %v1370 = vsel %vm1369, %v1364, %v1366
        %v1371 = vsel %vm1369, %v1366, %v1368
        %v1373 = vsel %vm403, %v1344, 0
        %v1376 = vsel %vm403, %v1345, 0
        %v1379 = vand.u32 %v1370, %v413
        %v1382 = vand.u32 %v1371, %v413
        %1384 = vmatprep.subr.bf16.mxu0 0
        %1385 = vmatpush1.bf16.msra.mxu0 0
        %1386 = vmatprep.subr.bf16.mxu0 0
        %1387 = vmatpush1.bf16.msra.mxu0 0
        %1388 = vmatprep.subr.bf16.mxu0 0
        %1389 = vmatpush1.bf16.msra.mxu0 0
        %1390 = vmatprep.subr.bf16.mxu0 0
        %1391 = vmatpush1.bf16.msra.mxu0 0
        %1392 = vmatprep.subr.bf16.mxu0 0
        %1393 = vmatpush1.bf16.msra.mxu0 0
        %1394 = vmatprep.subr.bf16.mxu0 0
        %1395 = vmatpush1.bf16.msra.mxu0 0
        %1396 = vmatprep.subr.bf16.mxu0 0
        %1397 = vmatpush1.bf16.msra.mxu0 0
        %1398 = vmatprep.subr.bf16.mxu0 %v1382
        %1399 = vmatpush1.bf16.msra.mxu0 %v1379
        %1400 = vmatprep.subr.bf16.mxu0 0
        %1401 = vmatpush2.bf16.msra.mxu0 0
        %1402 = vmatprep.subr.bf16.mxu0 0
        %1403 = vmatpush2.bf16.msra.mxu0 0
        %1404 = vmatprep.subr.bf16.mxu0 0
        %1405 = vmatpush2.bf16.msra.mxu0 0
        %1406 = vmatprep.subr.bf16.mxu0 0
        %1407 = vmatpush2.bf16.msra.mxu0 0
        %1408 = vmatprep.subr.bf16.mxu0 0
        %1409 = vmatpush2.bf16.msra.mxu0 0
        %1410 = vmatprep.subr.bf16.mxu0 0
        %1411 = vmatpush2.bf16.msra.mxu0 0
        %1412 = vmatprep.subr.bf16.mxu0 0
        %1413 = vmatpush2.bf16.msra.mxu0 0
        %1414 = vmatprep.subr.bf16.mxu0 0
        %1415 = vmatpush2.bf16.msra.mxu0 0
        %1416 = vmatprep.mubr.bf16.mxu0 0
        %1417 = vmatmul.mubr.bf16.gmra.mxu0 %v1373
        %v1418 = vpop.f32.mrf.mxu0
        %v1419 = vadd.f32 0.0, %v1418
        %v1420 = vpop.f32.mrf.mxu0
        %v1421 = vadd.f32 0.0, %v1420
        %v1422 = vpop.f32.mrf.mxu0
        %v1423 = vadd.f32 0.0, %v1422
        %v1424 = vpop.f32.mrf.mxu0
        %v1425 = vadd.f32 0.0, %v1424
        %1426 = vmatprep.mubr.bf16.mxu0 0
        %1427 = vmatmul.mubr.bf16.gmra.mxu0 %v1376
        %v1428 = vpop.f32.mrf.mxu0
        %v1429 = vadd.f32 0.0, %v1428
        %v1430 = vpop.f32.mrf.mxu0
        %v1431 = vadd.f32 0.0, %v1430
        %v1432 = vpop.f32.mrf.mxu0
        %v1433 = vadd.f32 0.0, %v1432
        %v1434 = vpop.f32.mrf.mxu0
        %v1435 = vadd.f32 0.0, %v1434
        %1436 = vdwg.mxu0
        %v1437 = vadd.f32 %v1315, %v1419
        %v1438 = vadd.f32 %v1316, %v1421
        %v1439 = vadd.f32 %v1317, %v1423
        %v1440 = vadd.f32 %v1318, %v1425
        %v1441 = vadd.f32 %v1319, %v1429
        %v1442 = vadd.f32 %v1320, %v1431
        %v1443 = vadd.f32 %v1321, %v1433
        %v1444 = vadd.f32 %v1322, %v1435
        %v1445 = vld [vmem:[%s4] sm:$0xff]
        %v1446 = vld [vmem:[%s4 + $0x8] sm:$0xff]
        %v1447 = vld [vmem:[%s4 + $0x10] sm:$0xff]
        %v1448 = vld [vmem:[%s4 + $0x18] sm:$0xff]
        %1450 = vset.pattern.permute.xlu0 0
        %1451 = vperm.xlu0 %1450, %v1445
        %v1452 = vpop.permute.xlu0 %1451
        %1455 = vset.pattern.permute.xlu0 0
        %1456 = vperm.xlu0 %1455, %v1446
        %v1457 = vpop.permute.xlu0 %1456
        %1460 = vset.pattern.permute.xlu0 0
        %1461 = vperm.xlu0 %1460, %v1447
        %v1462 = vpop.permute.xlu0 %1461
        %1465 = vset.pattern.permute.xlu0 0
        %1466 = vperm.xlu0 %1465, %v1448
        %v1467 = vpop.permute.xlu0 %1466
        %v1469 = vadd.f32 %v1437, %v1452
        %v1470 = vadd.f32 %v1438, %v1452
        %v1471 = vadd.f32 %v1439, %v1457
        %v1472 = vadd.f32 %v1440, %v1457
        %v1473 = vadd.f32 %v1441, %v1462
        %v1474 = vadd.f32 %v1442, %v1462
        %v1475 = vadd.f32 %v1443, %v1467
        %v1476 = vadd.f32 %v1444, %v1467
        %v1477 = vxor.u32 %v1469, 2147483648
        %v1478 = vxor.u32 %v1470, 2147483648
        %v1479 = vxor.u32 %v1471, 2147483648
        %v1480 = vxor.u32 %v1472, 2147483648
        %v1481 = vxor.u32 %v1473, 2147483648
        %v1482 = vxor.u32 %v1474, 2147483648
        %v1483 = vxor.u32 %v1475, 2147483648
        %v1484 = vxor.u32 %v1476, 2147483648
        %v1485 = vmul.f32 %v1477, 1.442695
        %v1486 = vpow.pop %v1485
        %v1487 = vmul.f32 %v1478, 1.442695
        %v1488 = vpow.pop %v1487
        %v1489 = vmul.f32 %v1479, 1.442695
        %v1490 = vpow.pop %v1489
        %v1491 = vmul.f32 %v1480, 1.442695
        %v1492 = vpow.pop %v1491
        %v1493 = vmul.f32 %v1481, 1.442695
        %v1494 = vpow.pop %v1493
        %v1495 = vmul.f32 %v1482, 1.442695
        %v1496 = vpow.pop %v1495
        %v1497 = vmul.f32 %v1483, 1.442695
        %v1498 = vpow.pop %v1497
        %v1499 = vmul.f32 %v1484, 1.442695
        %v1500 = vpow.pop %v1499
        %v1501 = vadd.f32 %v1486, 1.0
        %v1502 = vadd.f32 %v1488, 1.0
        %v1503 = vadd.f32 %v1490, 1.0
        %v1504 = vadd.f32 %v1492, 1.0
        %v1505 = vadd.f32 %v1494, 1.0
        %v1506 = vadd.f32 %v1496, 1.0
        %v1507 = vadd.f32 %v1498, 1.0
        %v1508 = vadd.f32 %v1500, 1.0
        %v1509 = vrcp.pop %v1501
        %v1510 = vmul.f32 1.0, %v1509
        %v1511 = vrcp.pop %v1502
        %v1512 = vmul.f32 1.0, %v1511
        %v1513 = vrcp.pop %v1503
        %v1514 = vmul.f32 1.0, %v1513
        %v1515 = vrcp.pop %v1504
        %v1516 = vmul.f32 1.0, %v1515
        %v1517 = vrcp.pop %v1505
        %v1518 = vmul.f32 1.0, %v1517
        %v1519 = vrcp.pop %v1506
        %v1520 = vmul.f32 1.0, %v1519
        %v1521 = vrcp.pop %v1507
        %v1522 = vmul.f32 1.0, %v1521
        %v1523 = vrcp.pop %v1508
        %v1524 = vmul.f32 1.0, %v1523
        %v1525 = vmul.f32 %v1469, %v1510
        %v1526 = vmul.f32 %v1470, %v1512
        %v1527 = vmul.f32 %v1471, %v1514
        %v1528 = vmul.f32 %v1472, %v1516
        %v1529 = vmul.f32 %v1473, %v1518
        %v1530 = vmul.f32 %v1474, %v1520
        %v1531 = vmul.f32 %v1475, %v1522
        %v1532 = vmul.f32 %v1476, %v1524
        %v1533 = vld [vmem:[%s5] sm:$0xf]
        %v1534 = vld [vmem:[%s5 + $0x4] sm:$0xf]
        %v1535 = vld [vmem:[%s5 + $0x8] sm:$0xf]
        %v1536 = vpack.c.bf16 %v1527, %v1525
        %v1537 = vpack.c.bf16 %v1528, %v1526
        %v1538 = vpack.c.bf16 %v1531, %v1529
        %v1539 = vpack.c.bf16 %v1532, %v1530
        %v1540 = vld [vmem:[%s6] sm:$0xff]
        %v1541 = vld [vmem:[%s6 + $0x8] sm:$0xff]
        %v1542 = vld [vmem:[%s6 + $0x10] sm:$0xff]
        %1544 = vset.pattern.permute.xlu0 0
        %1545 = vperm.xlu0 %1544, %v1540
        %v1546 = vpop.permute.xlu0 %1545
        %1549 = vset.pattern.permute.xlu0 0
        %1550 = vperm.xlu0 %1549, %v1541
        %v1551 = vpop.permute.xlu0 %1550
        %1554 = vset.pattern.permute.xlu0 0
        %1555 = vperm.xlu0 %1554, %v1542
        %v1556 = vpop.permute.xlu0 %1555
        %v1561 = vunpack.c.l.b16 %v1533
        %v1562 = vunpack.c.l.b16 %v1534
        %v1563 = vunpack.c.l.b16 %v1535
        %v1564 = vpack.c.b16 %v1562, %v1561
        %v1565 = vpack.c.b16 %v1563, %v1563
        %vm1566 = vcmask 261120
        %v1568 = vsel %vm1566, %v1564, 0
        %v1571 = vsel %vm1566, %v1565, 0
        %1573 = vmatprep.subr.bf16.mxu0 0
        %1574 = vmatpush1.bf16.msra.mxu0 0
        %1575 = vmatprep.subr.bf16.mxu0 0
        %1576 = vmatpush1.bf16.msra.mxu0 0
        %1577 = vmatprep.subr.bf16.mxu0 0
        %1578 = vmatpush1.bf16.msra.mxu0 0
        %1579 = vmatprep.subr.bf16.mxu0 0
        %1580 = vmatpush1.bf16.msra.mxu0 0
        %1581 = vmatprep.subr.bf16.mxu0 0
        %1582 = vmatpush1.bf16.msra.mxu0 0
        %1583 = vmatprep.subr.bf16.mxu0 0
        %1584 = vmatpush1.bf16.msra.mxu0 0
        %1585 = vmatprep.subr.bf16.mxu0 %v1539
        %1586 = vmatpush1.bf16.msra.mxu0 %v1538
        %1587 = vmatprep.subr.bf16.mxu0 %v1537
        %1588 = vmatpush1.bf16.msra.mxu0 %v1536
        %1589 = vmatprep.subr.bf16.mxu0 0
        %1590 = vmatpush2.bf16.msra.mxu0 0
        %1591 = vmatprep.subr.bf16.mxu0 0
        %1592 = vmatpush2.bf16.msra.mxu0 0
        %1593 = vmatprep.subr.bf16.mxu0 0
        %1594 = vmatpush2.bf16.msra.mxu0 0
        %1595 = vmatprep.subr.bf16.mxu0 0
        %1596 = vmatpush2.bf16.msra.mxu0 0
        %1597 = vmatprep.subr.bf16.mxu0 0
        %1598 = vmatpush2.bf16.msra.mxu0 0
        %1599 = vmatprep.subr.bf16.mxu0 0
        %1600 = vmatpush2.bf16.msra.mxu0 0
        %1601 = vmatprep.subr.bf16.mxu0 0
        %1602 = vmatpush2.bf16.msra.mxu0 0
        %1603 = vmatprep.subr.bf16.mxu0 0
        %1604 = vmatpush2.bf16.msra.mxu0 0
        %1605 = vmatprep.mubr.bf16.mxu0 0
        %1606 = vmatmul.mubr.bf16.gmra.mxu0 %v1568
        %v1607 = vpop.f32.mrf.mxu0
        %v1608 = vadd.f32 %v1546, %v1607
        %v1609 = vpop.f32.mrf.mxu0
        %v1610 = vadd.f32 %v1546, %v1609
        %v1611 = vpop.f32.mrf.mxu0
        %v1612 = vadd.f32 %v1551, %v1611
        %v1613 = vpop.f32.mrf.mxu0
        %v1614 = vadd.f32 %v1551, %v1613
        %1615 = vmatprep.mubr.bf16.mxu0 0
        %1616 = vmatmul.mubr.bf16.gmra.mxu0 %v1571
        %v1617 = vpop.f32.mrf.mxu0
        %v1618 = vadd.f32 %v1556, %v1617
        %v1619 = vpop.f32.mrf.mxu0
        %v1620 = vadd.f32 %v1556, %v1619
        %v1621 = vpop.f32.mrf.mxu0
        %v1622 = vpop.f32.mrf.mxu0
        %1623 = vdwg.mxu0
        %1624 = vst [vmem:[%s295] sm:$0xff] %v1608
        %1625 = vst [vmem:[%s295 + $0x8] sm:$0xff] %v1610
        %1626 = vst [vmem:[%s295 + $0x10] sm:$0xff] %v1612
        %1627 = vst [vmem:[%s295 + $0x18] sm:$0xff] %v1614
        %1628 = vst [vmem:[%s295 + $0x20] sm:$0xff] %v1618
        %1629 = vst [vmem:[%s295 + $0x28] sm:$0xff] %v1620
        %s1630 = sand.u32 %s197, 1
        %s1631 = scalar_lea.sflag [#allocation3], %s1630
        %s1632 = sand.u32 %s197, 1
        %s1633 = smul.addr %s1632, 48
        %s1634 = scalar_lea.vmem [#allocation2], %s1633
        // Predicated region
        $region49: #{tpu_custom_call.1} parent=47 // pred_check
          %p1635 = pneg %p207
        $region50: #{tpu_custom_call.1} parent=47 // pred_check_branch
          %1637 = sbr.rel (%p1635) target = $region52
        $region51: #{tpu_custom_call.1} parent=47 // pred_region
          %s1639 = ssub.s32 768, 768
          %1640 = vsyncadd %s1631, %s1639
          %s1641 = smul.addr %s26, 6
          %s1642 = smul.addr %s25, 6
          %s1643 = sadd.s32 %s1641, %s1642
          %s1644 = smul.addr %s1643, 128
          %s1645 = scalar_lea.hbm %s7, %s1644
          %s1646 = sshll.u32 %s1634, 4
          %s1647 = int_to_ptr.vmem [resolvable:$true] %s1646
          %1652 = dma.vmem_to_hbm [thread:$0]  %s1647, 768, %s1645, %s1631, 256, 256, 16
        $region52: #{tpu_custom_call.1} parent=47 // pred_fallthru
          _
      $region48: #{tpu_custom_call.1} parent=5 // pred_fallthru
        _
      %p1653 = scmp.le.s32.totalorder 2, %s16
      // Predicated region
      $region53: #{tpu_custom_call.1} parent=5 // pred_check
        %p1654 = pneg %p1653
      $region54: #{tpu_custom_call.1} parent=5 // pred_check_branch
        %1656 = sbr.rel (%p1654) target = $region56
      $region55: #{tpu_custom_call.1} parent=5 // pred_region
        %s1657 = ssub.s32 %s16, 2
        // Predicated region
        $region57: #{tpu_custom_call.1} parent=55 // pred_check
          %p1658 = pneg %p213
        $region58: #{tpu_custom_call.1} parent=55 // pred_check_branch
          %1660 = sbr.rel (%p1658) target = $region60
        $region59: #{tpu_custom_call.1} parent=55 // pred_region
          %s1661 = sand.u32 %s198, 1
          %s1662 = scalar_lea.sflag [#allocation3], %s1661
          %s1663 = sand.u32 %s198, 1
          %s1664 = smul.addr %s1663, 48
          %s1665 = scalar_lea.vmem [#allocation2], %s1664
          %1666 = dma.done %s1662, 768
        $region60: #{tpu_custom_call.1} parent=55 // pred_fallthru
          _
      $region56: #{tpu_custom_call.1} parent=5 // pred_fallthru
        _
    $region6: #{tpu_custom_call.1} parent=1 // loop_footer
      %s20 = sadd.s32 1, %s16
    $region7: #{tpu_custom_call.1} parent=1 // loop_footer_branch
      %15 = sbr.rel target = $region3
    $region8: #{tpu_custom_call.1} parent=1 // loop_exit
      _
    %1667 = vsyncpa [#allocation3], 1
    %s1668 = scalar_lea.sflag [#allocation3], 1
    %1669 = vsyncpa %s1668, 1

</llo_original>
